<compile_context>
chip_gen: v5e
topology: v5e:2x2
jax: 0.10.0
libtpu: 0.0.40
codegen_flags: <defaults>
</compile_context>

<pallas_src>
import functools
import math

import jax
import jax.numpy as jnp
from jax import lax
from jax.experimental import pallas as pl
from jax.experimental.pallas import tpu as pltpu


# ----------------------------------------------------------------------------
# Fused kernel: stacked LSTM (time loop in-kernel) + final linear layer.
# ----------------------------------------------------------------------------
def _fused_lstm_fc_kernel(num_layers, hidden_size, unroll, *refs):
    """refs (from pallas_call):
         in:  x_ref (T,B,I),
              [wx_l (in_l,4H) bf16, whh_l (H,4H) bf16, b_l (1,4H) f32] * L,
              wfc (H,O) f32, bfc (1,O) f32
         out: out_ref (B, O)
         scratch: gx_scr (T,B,4H) f32   -- hoisted input-projection gates
                  seq_scr (T,B,H) f32   -- inter-layer h sequence (in-place reuse)
       Gate column order is [i, f, o | g] (pre-permuted at init time).
    """
    H = hidden_size
    x_ref = refs[0]
    layer_refs = refs[1:1 + 3 * num_layers]
    wfc_ref, bfc_ref, out_ref, gx_scr, seq_scr = refs[1 + 3 * num_layers:]

    T, B = x_ref.shape[0], x_ref.shape[1]

    def input_projection(seq_2d, wx_ref, b_ref):
        # One big (T*B, in) x (in, 4H) MXU matmul; bias added once, in f32.
        gx = (jnp.dot(seq_2d.astype(wx_ref.dtype), wx_ref[...],
                      preferred_element_type=jnp.float32)
              + b_ref[...])
        gx_scr[...] = gx.reshape(T, B, 4 * H)               # lane-dense (4H) store

    def recurrence(whh_ref, store_seq):
        whh = whh_ref[...]                                   # hoisted: load W_hh once

        def body(t, carry):
            h, c = carry
            gates = gx_scr[t] + jnp.dot(h.astype(whh.dtype), whh,
                                        preferred_element_type=jnp.float32)
            # sigmoid(x) = 0.5*tanh(0.5*x) + 0.5  -> one EUP push per element.
            sig = 0.5 * jnp.tanh(0.5 * gates[:, :3 * H]) + 0.5   # [i | f | o]
            g_g = jnp.tanh(gates[:, 3 * H:])
            c_new = sig[:, H:2 * H] * c + sig[:, :H] * g_g
            h_new = sig[:, 2 * H:3 * H] * jnp.tanh(c_new)
            if store_seq:
                seq_scr[t] = h_new
            return h_new, c_new

        zeros = jnp.zeros((B, H), jnp.float32)
        h_last, _ = lax.fori_loop(0, T, body, (zeros, zeros), unroll=unroll)
        return h_last

    # Layer 0 reads the input sequence.
    wx, whh, b = layer_refs[0], layer_refs[1], layer_refs[2]
    I = x_ref.shape[2]
    input_projection(x_ref[...].reshape(T * B, I), wx, b)
    h_top = recurrence(whh, store_seq=num_layers > 1)

    # Later layers: full read of seq_scr happens here, BEFORE the time loop
    # overwrites it in place -> in-place reuse is safe for any num_layers.
    for l in range(1, num_layers):
        wx, whh, b = layer_refs[3 * l], layer_refs[3 * l + 1], layer_refs[3 * l + 2]
        input_projection(seq_scr[...].reshape(T * B, H), wx, b)
        h_top = recurrence(whh, store_seq=l < num_layers - 1)

    # fc(output[:, -1, :]) -- the top layer's final hidden state.
    out_ref[...] = (jnp.dot(h_top, wfc_ref[...],
                            preferred_element_type=jnp.float32)
                    + bfc_ref[...])


# ----------------------------------------------------------------------------
# Wrapper
# ----------------------------------------------------------------------------
def sequential_lstm_forward(x, params, pred_steps, *, batch_tile=None, unroll=8):
    """x: (B, T, input_size) -> (B, pred_steps, output_size) like the module."""
    B, T, I = x.shape
    lstm = params["lstm"]
    num_layers = len(lstm)
    H = lstm[0]["whh"].shape[0]
    O = params["fc"]["w_t"].shape[1]

    TB = B if batch_tile is None else batch_tile
    assert B % TB == 0, "batch must be divisible by batch_tile"

    # Time-major layout so the in-kernel loop indexes the leading axis.
    x_tbi = jnp.transpose(x, (1, 0, 2))                      # (T, B, I)

    inputs = [x_tbi]
    in_specs = [pl.BlockSpec((T, TB, I), lambda b: (0, b, 0))]
    for layer in lstm:
        inputs += [layer["wx"], layer["whh"], layer["b"]]
        in_specs += [
            pl.BlockSpec(layer["wx"].shape, lambda b: (0, 0)),
            pl.BlockSpec(layer["whh"].shape, lambda b: (0, 0)),
            pl.BlockSpec(layer["b"].shape, lambda b: (0, 0)),
        ]
    inputs += [params["fc"]["w_t"], params["fc"]["b"]]
    in_specs += [
        pl.BlockSpec(params["fc"]["w_t"].shape, lambda b: (0, 0)),
        pl.BlockSpec(params["fc"]["b"].shape, lambda b: (0, 0)),
    ]

    kernel = functools.partial(_fused_lstm_fc_kernel, num_layers, H, unroll)
    out = pl.pallas_call(
        kernel,
        out_shape=jax.ShapeDtypeStruct((B, O), jnp.float32),
        grid=(B // TB,),                                     # batch-parallel (v7x: 2 TCs)
        in_specs=in_specs,
        out_specs=pl.BlockSpec((TB, O), lambda b: (b, 0)),
        scratch_shapes=[pltpu.VMEM((T, TB, 4 * H), jnp.float32),
                        pltpu.VMEM((T, TB, H), jnp.float32)],
        compiler_params=pltpu.CompilerParams(
            dimension_semantics=("parallel",)),
    )(*inputs)
    return out.reshape(-1, pred_steps, 1)                    # .view(-1, pred_steps, 1)


# ----------------------------------------------------------------------------
# Parameters: raw PyTorch-shaped weights + packing into the kernel layout.
# ----------------------------------------------------------------------------
def init_raw_params(key, input_size, hidden_size, num_layers, output_size, pred_steps):
    scale = 1.0 / math.sqrt(hidden_size)
    layers = []
    for l in range(num_layers):
        in_sz = input_size if l == 0 else hidden_size
        key, k1, k2, k3, k4 = jax.random.split(key, 5)
        layers.append(dict(
            w_ih=jax.random.uniform(k1, (4 * hidden_size, in_sz), jnp.float32, -scale, scale),
            w_hh=jax.random.uniform(k2, (4 * hidden_size, hidden_size), jnp.float32, -scale, scale),
            b_ih=jax.random.uniform(k3, (4 * hidden_size,), jnp.float32, -scale, scale),
            b_hh=jax.random.uniform(k4, (4 * hidden_size,), jnp.float32, -scale, scale),
        ))
    key, k1, k2 = jax.random.split(key, 3)
    fc_out = output_size * pred_steps
    fc_w = jax.random.uniform(k1, (fc_out, hidden_size), jnp.float32, -scale, scale)
    fc_b = jax.random.uniform(k2, (fc_out,), jnp.float32, -scale, scale)
    return {"lstm": layers, "fc_w": fc_w, "fc_b": fc_b}


def pack_params(raw, hidden_size, *, matmul_dtype=jnp.bfloat16):
    """Transpose W_ih / W_hh to (in,4H)/(H,4H), keep them SEPARATE (input
    projection is hoisted), pre-sum biases, reorder gate columns from PyTorch
    [i, f, g, o] to [i, f, o, g], and store matmul weights in bf16."""
    H = hidden_size
    perm = jnp.array([0, 1, 3, 2])

    def reorder_mat(w):                       # (4H, X) with gate row-blocks permuted
        return w.reshape(4, H, -1)[perm].reshape(4 * H, -1)

    def reorder_vec(b):
        return b.reshape(4, H)[perm].reshape(4 * H)

    lstm = []
    for lyr in raw["lstm"]:
        wx = reorder_mat(lyr["w_ih"]).T.astype(matmul_dtype)     # (in, 4H) bf16
        whh = reorder_mat(lyr["w_hh"]).T.astype(matmul_dtype)    # (H, 4H) bf16
        b = (reorder_vec(lyr["b_ih"]) + reorder_vec(lyr["b_hh"])).reshape(1, 4 * H)
        lstm.append({"wx": wx, "whh": whh, "b": b})              # bias kept f32
    return {"lstm": lstm,
            "fc": {"w_t": raw["fc_w"].T, "b": raw["fc_b"].reshape(1, -1)}}


# ----------------------------------------------------------------------------
# Pure-JAX reference (standard PyTorch gate order, f32) for a correctness check.
# ----------------------------------------------------------------------------
def reference_forward(x, raw, pred_steps):
    B, T, _ = x.shape
    seq = x
    for lyr in raw["lstm"]:
        H = lyr["w_hh"].shape[1]
        w_ih, w_hh, b = lyr["w_ih"], lyr["w_hh"], lyr["b_ih"] + lyr["b_hh"]

        def step(carry, x_t, w_ih=w_ih, w_hh=w_hh, b=b, H=H):
            h, c = carry
            gates = x_t @ w_ih.T + h @ w_hh.T + b
            i = jax.nn.sigmoid(gates[:, :H])
            f = jax.nn.sigmoid(gates[:, H:2 * H])
            g = jnp.tanh(gates[:, 2 * H:3 * H])
            o = jax.nn.sigmoid(gates[:, 3 * H:])
            c = f * c + i * g
            h = o * jnp.tanh(c)
            return (h, c), h

        init = (jnp.zeros((B, H), jnp.float32), jnp.zeros((B, H), jnp.float32))
        _, ys = lax.scan(step, init, jnp.transpose(seq, (1, 0, 2)))
        seq = jnp.transpose(ys, (1, 0, 2))
    out = seq[:, -1, :] @ raw["fc_w"].T + raw["fc_b"]
    return out.reshape(-1, pred_steps, 1)


if __name__ == "__main__":
    batch, seq_len = 8, 8
    input_size, hidden_size, num_layers = 16, 32, 2
    output_size, pred_steps = 1, 4     # output_size=1 so .view(-1, pred_steps, 1) keeps batch

    key = jax.random.PRNGKey(0)
    key, kx = jax.random.split(key)
    x = jax.random.normal(kx, (batch, seq_len, input_size), jnp.float32)

    raw = init_raw_params(key, input_size, hidden_size, num_layers, output_size, pred_steps)
    params = pack_params(raw, hidden_size)

    fwd = jax.jit(functools.partial(sequential_lstm_forward, pred_steps=pred_steps))
    out = fwd(x, params)
    jax.block_until_ready(out)

    assert out.shape == (batch, pred_steps, output_size), out.shape

    ref = reference_forward(x, raw, pred_steps)
    # bf16-at-the-dot tolerance (state/elementwise math stays f32).
    assert jnp.allclose(out, ref, rtol=2e-2, atol=2e-2), float(jnp.max(jnp.abs(out - ref)))

    print("KERNEL_OK")
</pallas_src>

<mosaic_0001>
module attributes {stable_mosaic.version = 11 : i64} {
  func.func @_fused_lstm_fc_kernel(%arg0: i32, %arg1: memref<8x8x16xf32, #tpu.memory_space<vmem>>, %arg2: memref<16x128xbf16, #tpu.memory_space<vmem>>, %arg3: memref<32x128xbf16, #tpu.memory_space<vmem>>, %arg4: memref<1x128xf32, #tpu.memory_space<vmem>>, %arg5: memref<32x128xbf16, #tpu.memory_space<vmem>>, %arg6: memref<32x128xbf16, #tpu.memory_space<vmem>>, %arg7: memref<1x128xf32, #tpu.memory_space<vmem>>, %arg8: memref<32x4xf32, #tpu.memory_space<vmem>>, %arg9: memref<1x4xf32, #tpu.memory_space<vmem>>, %arg10: memref<8x4xf32, #tpu.memory_space<vmem>>, %arg11: memref<8x8x128xf32, #tpu.memory_space<vmem>>, %arg12: memref<8x8x32xf32, #tpu.memory_space<vmem>>) attributes {dimension_semantics = [#tpu.dimension_semantics<parallel>], iteration_bounds = array<i64: 1>, scalar_prefetch = 0 : i64, scratch_operands = 2 : i64, tpu.core_type = #tpu.core_type<tc>, window_params = [{transform_indices = @transform_0, window_bounds = array<i64: 8, 8, 16>}, {pipeline_mode = #tpu.pipeline_mode<synchronous>, transform_indices = @transform_1, window_bounds = array<i64: 16, 128>}, {pipeline_mode = #tpu.pipeline_mode<synchronous>, transform_indices = @transform_2, window_bounds = array<i64: 32, 128>}, {pipeline_mode = #tpu.pipeline_mode<synchronous>, transform_indices = @transform_3, window_bounds = array<i64: 1, 128>}, {pipeline_mode = #tpu.pipeline_mode<synchronous>, transform_indices = @transform_4, window_bounds = array<i64: 32, 128>}, {pipeline_mode = #tpu.pipeline_mode<synchronous>, transform_indices = @transform_5, window_bounds = array<i64: 32, 128>}, {pipeline_mode = #tpu.pipeline_mode<synchronous>, transform_indices = @transform_6, window_bounds = array<i64: 1, 128>}, {pipeline_mode = #tpu.pipeline_mode<synchronous>, transform_indices = @transform_7, window_bounds = array<i64: 32, 4>}, {pipeline_mode = #tpu.pipeline_mode<synchronous>, transform_indices = @transform_8, window_bounds = array<i64: 1, 4>}, {transform_indices = @transform_9, window_bounds = array<i64: 8, 4>}]} {
    %c0 = arith.constant 0 : index
    %c0_0 = arith.constant 0 : index
    %c0_1 = arith.constant 0 : index
    %0 = vector.load %arg1[%c0, %c0_0, %c0_1] : memref<8x8x16xf32, #tpu.memory_space<vmem>>, vector<8x8x16xf32>
    %1 = vector.shape_cast %0 : vector<8x8x16xf32> to vector<64x16xf32>
    %2 = arith.truncf %1 : vector<64x16xf32> to vector<64x16xbf16>
    %c0_2 = arith.constant 0 : index
    %c0_3 = arith.constant 0 : index
    %3 = vector.load %arg2[%c0_2, %c0_3] : memref<16x128xbf16, #tpu.memory_space<vmem>>, vector<16x128xbf16>
    %cst = arith.constant dense<0.000000e+00> : vector<64x128xf32>
    %4 = tpu.matmul %2, %3, %cst {dimension_numbers = #tpu.dot_dimension_numbers<[1], [0], [0], [1], [0, 0, 1, 1], [], []>} : vector<64x16xbf16>, vector<16x128xbf16>, vector<64x128xf32> -> vector<64x128xf32>
    %c0_4 = arith.constant 0 : index
    %c0_5 = arith.constant 0 : index
    %5 = vector.load %arg4[%c0_4, %c0_5] : memref<1x128xf32, #tpu.memory_space<vmem>>, vector<1x128xf32>
    %6 = vector.broadcast %5 : vector<1x128xf32> to vector<64x128xf32>
    %7 = arith.addf %4, %6 : vector<64x128xf32>
    %8 = vector.shape_cast %7 : vector<64x128xf32> to vector<8x8x128xf32>
    %c0_6 = arith.constant 0 : index
    %c0_7 = arith.constant 0 : index
    %c0_8 = arith.constant 0 : index
    %9 = vector.load %arg11[%c0_6, %c0_7, %c0_8] : memref<8x8x128xf32, #tpu.memory_space<vmem>>, vector<8x8x128xf32>
    tpu.vector_store %arg11[%c0_6, %c0_7, %c0_8], %8 {strides = array<i32>} : memref<8x8x128xf32, #tpu.memory_space<vmem>>, vector<8x8x128xf32>,
    %c0_9 = arith.constant 0 : index
    %c0_10 = arith.constant 0 : index
    %10 = vector.load %arg3[%c0_9, %c0_10] : memref<32x128xbf16, #tpu.memory_space<vmem>>, vector<32x128xbf16>
    %cst_11 = arith.constant 0.000000e+00 : f32
    %11 = vector.broadcast %cst_11 : f32 to vector<8x32xf32>
    %c0_i32 = arith.constant 0 : i32
    %12 = arith.index_cast %c0_i32 : i32 to index
    %c0_12 = arith.constant 0 : index
    %c0_13 = arith.constant 0 : index
    %13 = vector.load %arg11[%12, %c0_12, %c0_13] : memref<8x8x128xf32, #tpu.memory_space<vmem>>, vector<1x8x128xf32>
    %14 = vector.shape_cast %13 : vector<1x8x128xf32> to vector<8x128xf32>
    %15 = arith.truncf %11 : vector<8x32xf32> to vector<8x32xbf16>
    %cst_14 = arith.constant dense<0.000000e+00> : vector<8x128xf32>
    %16 = tpu.matmul %15, %10, %cst_14 {dimension_numbers = #tpu.dot_dimension_numbers<[1], [0], [0], [1], [0, 0, 1, 1], [], []>} : vector<8x32xbf16>, vector<32x128xbf16>, vector<8x128xf32> -> vector<8x128xf32>
    %17 = arith.addf %14, %16 : vector<8x128xf32>
    %18 = vector.extract_strided_slice %17 {offsets = [0, 0], sizes = [8, 96], strides = [1, 1]} : vector<8x128xf32> to vector<8x96xf32>
    %cst_15 = arith.constant 5.000000e-01 : f32
    %19 = vector.broadcast %cst_15 : f32 to vector<8x96xf32>
    %20 = arith.mulf %19, %18 : vector<8x96xf32>
    %21 = math.tanh %20 : vector<8x96xf32>
    %cst_16 = arith.constant 5.000000e-01 : f32
    %22 = vector.broadcast %cst_16 : f32 to vector<8x96xf32>
    %23 = arith.mulf %22, %21 : vector<8x96xf32>
    %cst_17 = arith.constant 5.000000e-01 : f32
    %24 = vector.broadcast %cst_17 : f32 to vector<8x96xf32>
    %25 = arith.addf %23, %24 : vector<8x96xf32>
    %26 = vector.extract_strided_slice %17 {offsets = [0, 96], sizes = [8, 32], strides = [1, 1]} : vector<8x128xf32> to vector<8x32xf32>
    %27 = math.tanh %26 : vector<8x32xf32>
    %28 = vector.extract_strided_slice %25 {offsets = [0, 32], sizes = [8, 32], strides = [1, 1]} : vector<8x96xf32> to vector<8x32xf32>
    %29 = arith.mulf %28, %11 : vector<8x32xf32>
    %30 = vector.extract_strided_slice %25 {offsets = [0, 0], sizes = [8, 32], strides = [1, 1]} : vector<8x96xf32> to vector<8x32xf32>
    %31 = arith.mulf %30, %27 : vector<8x32xf32>
    %32 = arith.addf %29, %31 : vector<8x32xf32>
    %33 = vector.extract_strided_slice %25 {offsets = [0, 64], sizes = [8, 32], strides = [1, 1]} : vector<8x96xf32> to vector<8x32xf32>
    %34 = math.tanh %32 : vector<8x32xf32>
    %35 = arith.mulf %33, %34 : vector<8x32xf32>
    %36 = arith.index_cast %c0_i32 : i32 to index
    %c0_18 = arith.constant 0 : index
    %c0_19 = arith.constant 0 : index
    %37 = vector.load %arg12[%36, %c0_18, %c0_19] : memref<8x8x32xf32, #tpu.memory_space<vmem>>, vector<1x8x32xf32>
    %38 = vector.shape_cast %37 : vector<1x8x32xf32> to vector<8x32xf32>
    %39 = vector.shape_cast %35 : vector<8x32xf32> to vector<1x8x32xf32>
    tpu.vector_store %arg12[%36, %c0_18, %c0_19], %39 {strides = array<i32>} : memref<8x8x32xf32, #tpu.memory_space<vmem>>, vector<1x8x32xf32>,
    %c1_i32 = arith.constant 1 : i32
    %40 = arith.index_cast %c1_i32 : i32 to index
    %c0_20 = arith.constant 0 : index
    %c0_21 = arith.constant 0 : index
    %41 = vector.load %arg11[%40, %c0_20, %c0_21] : memref<8x8x128xf32, #tpu.memory_space<vmem>>, vector<1x8x128xf32>
    %42 = vector.shape_cast %41 : vector<1x8x128xf32> to vector<8x128xf32>
    %43 = arith.truncf %35 : vector<8x32xf32> to vector<8x32xbf16>
    %cst_22 = arith.constant dense<0.000000e+00> : vector<8x128xf32>
    %44 = tpu.matmul %43, %10, %cst_22 {dimension_numbers = #tpu.dot_dimension_numbers<[1], [0], [0], [1], [0, 0, 1, 1], [], []>} : vector<8x32xbf16>, vector<32x128xbf16>, vector<8x128xf32> -> vector<8x128xf32>
    %45 = arith.addf %42, %44 : vector<8x128xf32>
    %46 = vector.extract_strided_slice %45 {offsets = [0, 0], sizes = [8, 96], strides = [1, 1]} : vector<8x128xf32> to vector<8x96xf32>
    %cst_23 = arith.constant 5.000000e-01 : f32
    %47 = vector.broadcast %cst_23 : f32 to vector<8x96xf32>
    %48 = arith.mulf %47, %46 : vector<8x96xf32>
    %49 = math.tanh %48 : vector<8x96xf32>
    %cst_24 = arith.constant 5.000000e-01 : f32
    %50 = vector.broadcast %cst_24 : f32 to vector<8x96xf32>
    %51 = arith.mulf %50, %49 : vector<8x96xf32>
    %cst_25 = arith.constant 5.000000e-01 : f32
    %52 = vector.broadcast %cst_25 : f32 to vector<8x96xf32>
    %53 = arith.addf %51, %52 : vector<8x96xf32>
    %54 = vector.extract_strided_slice %45 {offsets = [0, 96], sizes = [8, 32], strides = [1, 1]} : vector<8x128xf32> to vector<8x32xf32>
    %55 = math.tanh %54 : vector<8x32xf32>
    %56 = vector.extract_strided_slice %53 {offsets = [0, 32], sizes = [8, 32], strides = [1, 1]} : vector<8x96xf32> to vector<8x32xf32>
    %57 = arith.mulf %56, %32 : vector<8x32xf32>
    %58 = vector.extract_strided_slice %53 {offsets = [0, 0], sizes = [8, 32], strides = [1, 1]} : vector<8x96xf32> to vector<8x32xf32>
    %59 = arith.mulf %58, %55 : vector<8x32xf32>
    %60 = arith.addf %57, %59 : vector<8x32xf32>
    %61 = vector.extract_strided_slice %53 {offsets = [0, 64], sizes = [8, 32], strides = [1, 1]} : vector<8x96xf32> to vector<8x32xf32>
    %62 = math.tanh %60 : vector<8x32xf32>
    %63 = arith.mulf %61, %62 : vector<8x32xf32>
    %64 = arith.index_cast %c1_i32 : i32 to index
    %c0_26 = arith.constant 0 : index
    %c0_27 = arith.constant 0 : index
    %65 = vector.load %arg12[%64, %c0_26, %c0_27] : memref<8x8x32xf32, #tpu.memory_space<vmem>>, vector<1x8x32xf32>
    %66 = vector.shape_cast %65 : vector<1x8x32xf32> to vector<8x32xf32>
    %67 = vector.shape_cast %63 : vector<8x32xf32> to vector<1x8x32xf32>
    tpu.vector_store %arg12[%64, %c0_26, %c0_27], %67 {strides = array<i32>} : memref<8x8x32xf32, #tpu.memory_space<vmem>>, vector<1x8x32xf32>,
    %c2_i32 = arith.constant 2 : i32
    %68 = arith.index_cast %c2_i32 : i32 to index
    %c0_28 = arith.constant 0 : index
    %c0_29 = arith.constant 0 : index
    %69 = vector.load %arg11[%68, %c0_28, %c0_29] : memref<8x8x128xf32, #tpu.memory_space<vmem>>, vector<1x8x128xf32>
    %70 = vector.shape_cast %69 : vector<1x8x128xf32> to vector<8x128xf32>
    %71 = arith.truncf %63 : vector<8x32xf32> to vector<8x32xbf16>
    %cst_30 = arith.constant dense<0.000000e+00> : vector<8x128xf32>
    %72 = tpu.matmul %71, %10, %cst_30 {dimension_numbers = #tpu.dot_dimension_numbers<[1], [0], [0], [1], [0, 0, 1, 1], [], []>} : vector<8x32xbf16>, vector<32x128xbf16>, vector<8x128xf32> -> vector<8x128xf32>
    %73 = arith.addf %70, %72 : vector<8x128xf32>
    %74 = vector.extract_strided_slice %73 {offsets = [0, 0], sizes = [8, 96], strides = [1, 1]} : vector<8x128xf32> to vector<8x96xf32>
    %cst_31 = arith.constant 5.000000e-01 : f32
    %75 = vector.broadcast %cst_31 : f32 to vector<8x96xf32>
    %76 = arith.mulf %75, %74 : vector<8x96xf32>
    %77 = math.tanh %76 : vector<8x96xf32>
    %cst_32 = arith.constant 5.000000e-01 : f32
    %78 = vector.broadcast %cst_32 : f32 to vector<8x96xf32>
    %79 = arith.mulf %78, %77 : vector<8x96xf32>
    %cst_33 = arith.constant 5.000000e-01 : f32
    %80 = vector.broadcast %cst_33 : f32 to vector<8x96xf32>
    %81 = arith.addf %79, %80 : vector<8x96xf32>
    %82 = vector.extract_strided_slice %73 {offsets = [0, 96], sizes = [8, 32], strides = [1, 1]} : vector<8x128xf32> to vector<8x32xf32>
    %83 = math.tanh %82 : vector<8x32xf32>
    %84 = vector.extract_strided_slice %81 {offsets = [0, 32], sizes = [8, 32], strides = [1, 1]} : vector<8x96xf32> to vector<8x32xf32>
    %85 = arith.mulf %84, %60 : vector<8x32xf32>
    %86 = vector.extract_strided_slice %81 {offsets = [0, 0], sizes = [8, 32], strides = [1, 1]} : vector<8x96xf32> to vector<8x32xf32>
    %87 = arith.mulf %86, %83 : vector<8x32xf32>
    %88 = arith.addf %85, %87 : vector<8x32xf32>
    %89 = vector.extract_strided_slice %81 {offsets = [0, 64], sizes = [8, 32], strides = [1, 1]} : vector<8x96xf32> to vector<8x32xf32>
    %90 = math.tanh %88 : vector<8x32xf32>
    %91 = arith.mulf %89, %90 : vector<8x32xf32>
    %92 = arith.index_cast %c2_i32 : i32 to index
    %c0_34 = arith.constant 0 : index
    %c0_35 = arith.constant 0 : index
    %93 = vector.load %arg12[%92, %c0_34, %c0_35] : memref<8x8x32xf32, #tpu.memory_space<vmem>>, vector<1x8x32xf32>
    %94 = vector.shape_cast %93 : vector<1x8x32xf32> to vector<8x32xf32>
    %95 = vector.shape_cast %91 : vector<8x32xf32> to vector<1x8x32xf32>
    tpu.vector_store %arg12[%92, %c0_34, %c0_35], %95 {strides = array<i32>} : memref<8x8x32xf32, #tpu.memory_space<vmem>>, vector<1x8x32xf32>,
    %c3_i32 = arith.constant 3 : i32
    %96 = arith.index_cast %c3_i32 : i32 to index
    %c0_36 = arith.constant 0 : index
    %c0_37 = arith.constant 0 : index
    %97 = vector.load %arg11[%96, %c0_36, %c0_37] : memref<8x8x128xf32, #tpu.memory_space<vmem>>, vector<1x8x128xf32>
    %98 = vector.shape_cast %97 : vector<1x8x128xf32> to vector<8x128xf32>
    %99 = arith.truncf %91 : vector<8x32xf32> to vector<8x32xbf16>
    %cst_38 = arith.constant dense<0.000000e+00> : vector<8x128xf32>
    %100 = tpu.matmul %99, %10, %cst_38 {dimension_numbers = #tpu.dot_dimension_numbers<[1], [0], [0], [1], [0, 0, 1, 1], [], []>} : vector<8x32xbf16>, vector<32x128xbf16>, vector<8x128xf32> -> vector<8x128xf32>
    %101 = arith.addf %98, %100 : vector<8x128xf32>
    %102 = vector.extract_strided_slice %101 {offsets = [0, 0], sizes = [8, 96], strides = [1, 1]} : vector<8x128xf32> to vector<8x96xf32>
    %cst_39 = arith.constant 5.000000e-01 : f32
    %103 = vector.broadcast %cst_39 : f32 to vector<8x96xf32>
    %104 = arith.mulf %103, %102 : vector<8x96xf32>
    %105 = math.tanh %104 : vector<8x96xf32>
    %cst_40 = arith.constant 5.000000e-01 : f32
    %106 = vector.broadcast %cst_40 : f32 to vector<8x96xf32>
    %107 = arith.mulf %106, %105 : vector<8x96xf32>
    %cst_41 = arith.constant 5.000000e-01 : f32
    %108 = vector.broadcast %cst_41 : f32 to vector<8x96xf32>
    %109 = arith.addf %107, %108 : vector<8x96xf32>
    %110 = vector.extract_strided_slice %101 {offsets = [0, 96], sizes = [8, 32], strides = [1, 1]} : vector<8x128xf32> to vector<8x32xf32>
    %111 = math.tanh %110 : vector<8x32xf32>
    %112 = vector.extract_strided_slice %109 {offsets = [0, 32], sizes = [8, 32], strides = [1, 1]} : vector<8x96xf32> to vector<8x32xf32>
    %113 = arith.mulf %112, %88 : vector<8x32xf32>
    %114 = vector.extract_strided_slice %109 {offsets = [0, 0], sizes = [8, 32], strides = [1, 1]} : vector<8x96xf32> to vector<8x32xf32>
    %115 = arith.mulf %114, %111 : vector<8x32xf32>
    %116 = arith.addf %113, %115 : vector<8x32xf32>
    %117 = vector.extract_strided_slice %109 {offsets = [0, 64], sizes = [8, 32], strides = [1, 1]} : vector<8x96xf32> to vector<8x32xf32>
    %118 = math.tanh %116 : vector<8x32xf32>
    %119 = arith.mulf %117, %118 : vector<8x32xf32>
    %120 = arith.index_cast %c3_i32 : i32 to index
    %c0_42 = arith.constant 0 : index
    %c0_43 = arith.constant 0 : index
    %121 = vector.load %arg12[%120, %c0_42, %c0_43] : memref<8x8x32xf32, #tpu.memory_space<vmem>>, vector<1x8x32xf32>
    %122 = vector.shape_cast %121 : vector<1x8x32xf32> to vector<8x32xf32>
    %123 = vector.shape_cast %119 : vector<8x32xf32> to vector<1x8x32xf32>
    tpu.vector_store %arg12[%120, %c0_42, %c0_43], %123 {strides = array<i32>} : memref<8x8x32xf32, #tpu.memory_space<vmem>>, vector<1x8x32xf32>,
    %c4_i32 = arith.constant 4 : i32
    %124 = arith.index_cast %c4_i32 : i32 to index
    %c0_44 = arith.constant 0 : index
    %c0_45 = arith.constant 0 : index
    %125 = vector.load %arg11[%124, %c0_44, %c0_45] : memref<8x8x128xf32, #tpu.memory_space<vmem>>, vector<1x8x128xf32>
    %126 = vector.shape_cast %125 : vector<1x8x128xf32> to vector<8x128xf32>
    %127 = arith.truncf %119 : vector<8x32xf32> to vector<8x32xbf16>
    %cst_46 = arith.constant dense<0.000000e+00> : vector<8x128xf32>
    %128 = tpu.matmul %127, %10, %cst_46 {dimension_numbers = #tpu.dot_dimension_numbers<[1], [0], [0], [1], [0, 0, 1, 1], [], []>} : vector<8x32xbf16>, vector<32x128xbf16>, vector<8x128xf32> -> vector<8x128xf32>
    %129 = arith.addf %126, %128 : vector<8x128xf32>
    %130 = vector.extract_strided_slice %129 {offsets = [0, 0], sizes = [8, 96], strides = [1, 1]} : vector<8x128xf32> to vector<8x96xf32>
    %cst_47 = arith.constant 5.000000e-01 : f32
    %131 = vector.broadcast %cst_47 : f32 to vector<8x96xf32>
    %132 = arith.mulf %131, %130 : vector<8x96xf32>
    %133 = math.tanh %132 : vector<8x96xf32>
    %cst_48 = arith.constant 5.000000e-01 : f32
    %134 = vector.broadcast %cst_48 : f32 to vector<8x96xf32>
    %135 = arith.mulf %134, %133 : vector<8x96xf32>
    %cst_49 = arith.constant 5.000000e-01 : f32
    %136 = vector.broadcast %cst_49 : f32 to vector<8x96xf32>
    %137 = arith.addf %135, %136 : vector<8x96xf32>
    %138 = vector.extract_strided_slice %129 {offsets = [0, 96], sizes = [8, 32], strides = [1, 1]} : vector<8x128xf32> to vector<8x32xf32>
    %139 = math.tanh %138 : vector<8x32xf32>
    %140 = vector.extract_strided_slice %137 {offsets = [0, 32], sizes = [8, 32], strides = [1, 1]} : vector<8x96xf32> to vector<8x32xf32>
    %141 = arith.mulf %140, %116 : vector<8x32xf32>
    %142 = vector.extract_strided_slice %137 {offsets = [0, 0], sizes = [8, 32], strides = [1, 1]} : vector<8x96xf32> to vector<8x32xf32>
    %143 = arith.mulf %142, %139 : vector<8x32xf32>
    %144 = arith.addf %141, %143 : vector<8x32xf32>
    %145 = vector.extract_strided_slice %137 {offsets = [0, 64], sizes = [8, 32], strides = [1, 1]} : vector<8x96xf32> to vector<8x32xf32>
    %146 = math.tanh %144 : vector<8x32xf32>
    %147 = arith.mulf %145, %146 : vector<8x32xf32>
    %148 = arith.index_cast %c4_i32 : i32 to index
    %c0_50 = arith.constant 0 : index
    %c0_51 = arith.constant 0 : index
    %149 = vector.load %arg12[%148, %c0_50, %c0_51] : memref<8x8x32xf32, #tpu.memory_space<vmem>>, vector<1x8x32xf32>
    %150 = vector.shape_cast %149 : vector<1x8x32xf32> to vector<8x32xf32>
    %151 = vector.shape_cast %147 : vector<8x32xf32> to vector<1x8x32xf32>
    tpu.vector_store %arg12[%148, %c0_50, %c0_51], %151 {strides = array<i32>} : memref<8x8x32xf32, #tpu.memory_space<vmem>>, vector<1x8x32xf32>,
    %c5_i32 = arith.constant 5 : i32
    %152 = arith.index_cast %c5_i32 : i32 to index
    %c0_52 = arith.constant 0 : index
    %c0_53 = arith.constant 0 : index
    %153 = vector.load %arg11[%152, %c0_52, %c0_53] : memref<8x8x128xf32, #tpu.memory_space<vmem>>, vector<1x8x128xf32>
    %154 = vector.shape_cast %153 : vector<1x8x128xf32> to vector<8x128xf32>
    %155 = arith.truncf %147 : vector<8x32xf32> to vector<8x32xbf16>
    %cst_54 = arith.constant dense<0.000000e+00> : vector<8x128xf32>
    %156 = tpu.matmul %155, %10, %cst_54 {dimension_numbers = #tpu.dot_dimension_numbers<[1], [0], [0], [1], [0, 0, 1, 1], [], []>} : vector<8x32xbf16>, vector<32x128xbf16>, vector<8x128xf32> -> vector<8x128xf32>
    %157 = arith.addf %154, %156 : vector<8x128xf32>
    %158 = vector.extract_strided_slice %157 {offsets = [0, 0], sizes = [8, 96], strides = [1, 1]} : vector<8x128xf32> to vector<8x96xf32>
    %cst_55 = arith.constant 5.000000e-01 : f32
    %159 = vector.broadcast %cst_55 : f32 to vector<8x96xf32>
    %160 = arith.mulf %159, %158 : vector<8x96xf32>
    %161 = math.tanh %160 : vector<8x96xf32>
    %cst_56 = arith.constant 5.000000e-01 : f32
    %162 = vector.broadcast %cst_56 : f32 to vector<8x96xf32>
    %163 = arith.mulf %162, %161 : vector<8x96xf32>
    %cst_57 = arith.constant 5.000000e-01 : f32
    %164 = vector.broadcast %cst_57 : f32 to vector<8x96xf32>
    %165 = arith.addf %163, %164 : vector<8x96xf32>
    %166 = vector.extract_strided_slice %157 {offsets = [0, 96], sizes = [8, 32], strides = [1, 1]} : vector<8x128xf32> to vector<8x32xf32>
    %167 = math.tanh %166 : vector<8x32xf32>
    %168 = vector.extract_strided_slice %165 {offsets = [0, 32], sizes = [8, 32], strides = [1, 1]} : vector<8x96xf32> to vector<8x32xf32>
    %169 = arith.mulf %168, %144 : vector<8x32xf32>
    %170 = vector.extract_strided_slice %165 {offsets = [0, 0], sizes = [8, 32], strides = [1, 1]} : vector<8x96xf32> to vector<8x32xf32>
    %171 = arith.mulf %170, %167 : vector<8x32xf32>
    %172 = arith.addf %169, %171 : vector<8x32xf32>
    %173 = vector.extract_strided_slice %165 {offsets = [0, 64], sizes = [8, 32], strides = [1, 1]} : vector<8x96xf32> to vector<8x32xf32>
    %174 = math.tanh %172 : vector<8x32xf32>
    %175 = arith.mulf %173, %174 : vector<8x32xf32>
    %176 = arith.index_cast %c5_i32 : i32 to index
    %c0_58 = arith.constant 0 : index
    %c0_59 = arith.constant 0 : index
    %177 = vector.load %arg12[%176, %c0_58, %c0_59] : memref<8x8x32xf32, #tpu.memory_space<vmem>>, vector<1x8x32xf32>
    %178 = vector.shape_cast %177 : vector<1x8x32xf32> to vector<8x32xf32>
    %179 = vector.shape_cast %175 : vector<8x32xf32> to vector<1x8x32xf32>
    tpu.vector_store %arg12[%176, %c0_58, %c0_59], %179 {strides = array<i32>} : memref<8x8x32xf32, #tpu.memory_space<vmem>>, vector<1x8x32xf32>,
    %c6_i32 = arith.constant 6 : i32
    %180 = arith.index_cast %c6_i32 : i32 to index
    %c0_60 = arith.constant 0 : index
    %c0_61 = arith.constant 0 : index
    %181 = vector.load %arg11[%180, %c0_60, %c0_61] : memref<8x8x128xf32, #tpu.memory_space<vmem>>, vector<1x8x128xf32>
    %182 = vector.shape_cast %181 : vector<1x8x128xf32> to vector<8x128xf32>
    %183 = arith.truncf %175 : vector<8x32xf32> to vector<8x32xbf16>
    %cst_62 = arith.constant dense<0.000000e+00> : vector<8x128xf32>
    %184 = tpu.matmul %183, %10, %cst_62 {dimension_numbers = #tpu.dot_dimension_numbers<[1], [0], [0], [1], [0, 0, 1, 1], [], []>} : vector<8x32xbf16>, vector<32x128xbf16>, vector<8x128xf32> -> vector<8x128xf32>
    %185 = arith.addf %182, %184 : vector<8x128xf32>
    %186 = vector.extract_strided_slice %185 {offsets = [0, 0], sizes = [8, 96], strides = [1, 1]} : vector<8x128xf32> to vector<8x96xf32>
    %cst_63 = arith.constant 5.000000e-01 : f32
    %187 = vector.broadcast %cst_63 : f32 to vector<8x96xf32>
    %188 = arith.mulf %187, %186 : vector<8x96xf32>
    %189 = math.tanh %188 : vector<8x96xf32>
    %cst_64 = arith.constant 5.000000e-01 : f32
    %190 = vector.broadcast %cst_64 : f32 to vector<8x96xf32>
    %191 = arith.mulf %190, %189 : vector<8x96xf32>
    %cst_65 = arith.constant 5.000000e-01 : f32
    %192 = vector.broadcast %cst_65 : f32 to vector<8x96xf32>
    %193 = arith.addf %191, %192 : vector<8x96xf32>
    %194 = vector.extract_strided_slice %185 {offsets = [0, 96], sizes = [8, 32], strides = [1, 1]} : vector<8x128xf32> to vector<8x32xf32>
    %195 = math.tanh %194 : vector<8x32xf32>
    %196 = vector.extract_strided_slice %193 {offsets = [0, 32], sizes = [8, 32], strides = [1, 1]} : vector<8x96xf32> to vector<8x32xf32>
    %197 = arith.mulf %196, %172 : vector<8x32xf32>
    %198 = vector.extract_strided_slice %193 {offsets = [0, 0], sizes = [8, 32], strides = [1, 1]} : vector<8x96xf32> to vector<8x32xf32>
    %199 = arith.mulf %198, %195 : vector<8x32xf32>
    %200 = arith.addf %197, %199 : vector<8x32xf32>
    %201 = vector.extract_strided_slice %193 {offsets = [0, 64], sizes = [8, 32], strides = [1, 1]} : vector<8x96xf32> to vector<8x32xf32>
    %202 = math.tanh %200 : vector<8x32xf32>
    %203 = arith.mulf %201, %202 : vector<8x32xf32>
    %204 = arith.index_cast %c6_i32 : i32 to index
    %c0_66 = arith.constant 0 : index
    %c0_67 = arith.constant 0 : index
    %205 = vector.load %arg12[%204, %c0_66, %c0_67] : memref<8x8x32xf32, #tpu.memory_space<vmem>>, vector<1x8x32xf32>
    %206 = vector.shape_cast %205 : vector<1x8x32xf32> to vector<8x32xf32>
    %207 = vector.shape_cast %203 : vector<8x32xf32> to vector<1x8x32xf32>
    tpu.vector_store %arg12[%204, %c0_66, %c0_67], %207 {strides = array<i32>} : memref<8x8x32xf32, #tpu.memory_space<vmem>>, vector<1x8x32xf32>,
    %c7_i32 = arith.constant 7 : i32
    %208 = arith.index_cast %c7_i32 : i32 to index
    %c0_68 = arith.constant 0 : index
    %c0_69 = arith.constant 0 : index
    %209 = vector.load %arg11[%208, %c0_68, %c0_69] : memref<8x8x128xf32, #tpu.memory_space<vmem>>, vector<1x8x128xf32>
    %210 = vector.shape_cast %209 : vector<1x8x128xf32> to vector<8x128xf32>
    %211 = arith.truncf %203 : vector<8x32xf32> to vector<8x32xbf16>
    %cst_70 = arith.constant dense<0.000000e+00> : vector<8x128xf32>
    %212 = tpu.matmul %211, %10, %cst_70 {dimension_numbers = #tpu.dot_dimension_numbers<[1], [0], [0], [1], [0, 0, 1, 1], [], []>} : vector<8x32xbf16>, vector<32x128xbf16>, vector<8x128xf32> -> vector<8x128xf32>
    %213 = arith.addf %210, %212 : vector<8x128xf32>
    %214 = vector.extract_strided_slice %213 {offsets = [0, 0], sizes = [8, 96], strides = [1, 1]} : vector<8x128xf32> to vector<8x96xf32>
    %cst_71 = arith.constant 5.000000e-01 : f32
    %215 = vector.broadcast %cst_71 : f32 to vector<8x96xf32>
    %216 = arith.mulf %215, %214 : vector<8x96xf32>
    %217 = math.tanh %216 : vector<8x96xf32>
    %cst_72 = arith.constant 5.000000e-01 : f32
    %218 = vector.broadcast %cst_72 : f32 to vector<8x96xf32>
    %219 = arith.mulf %218, %217 : vector<8x96xf32>
    %cst_73 = arith.constant 5.000000e-01 : f32
    %220 = vector.broadcast %cst_73 : f32 to vector<8x96xf32>
    %221 = arith.addf %219, %220 : vector<8x96xf32>
    %222 = vector.extract_strided_slice %213 {offsets = [0, 96], sizes = [8, 32], strides = [1, 1]} : vector<8x128xf32> to vector<8x32xf32>
    %223 = math.tanh %222 : vector<8x32xf32>
    %224 = vector.extract_strided_slice %221 {offsets = [0, 32], sizes = [8, 32], strides = [1, 1]} : vector<8x96xf32> to vector<8x32xf32>
    %225 = arith.mulf %224, %200 : vector<8x32xf32>
    %226 = vector.extract_strided_slice %221 {offsets = [0, 0], sizes = [8, 32], strides = [1, 1]} : vector<8x96xf32> to vector<8x32xf32>
    %227 = arith.mulf %226, %223 : vector<8x32xf32>
    %228 = arith.addf %225, %227 : vector<8x32xf32>
    %229 = vector.extract_strided_slice %221 {offsets = [0, 64], sizes = [8, 32], strides = [1, 1]} : vector<8x96xf32> to vector<8x32xf32>
    %230 = math.tanh %228 : vector<8x32xf32>
    %231 = arith.mulf %229, %230 : vector<8x32xf32>
    %232 = arith.index_cast %c7_i32 : i32 to index
    %c0_74 = arith.constant 0 : index
    %c0_75 = arith.constant 0 : index
    %233 = vector.load %arg12[%232, %c0_74, %c0_75] : memref<8x8x32xf32, #tpu.memory_space<vmem>>, vector<1x8x32xf32>
    %234 = vector.shape_cast %233 : vector<1x8x32xf32> to vector<8x32xf32>
    %235 = vector.shape_cast %231 : vector<8x32xf32> to vector<1x8x32xf32>
    tpu.vector_store %arg12[%232, %c0_74, %c0_75], %235 {strides = array<i32>} : memref<8x8x32xf32, #tpu.memory_space<vmem>>, vector<1x8x32xf32>,
    %c8_i32 = arith.constant 8 : i32
    %c0_76 = arith.constant 0 : index
    %c0_77 = arith.constant 0 : index
    %c0_78 = arith.constant 0 : index
    %236 = vector.load %arg12[%c0_76, %c0_77, %c0_78] : memref<8x8x32xf32, #tpu.memory_space<vmem>>, vector<8x8x32xf32>
    %237 = vector.shape_cast %236 : vector<8x8x32xf32> to vector<64x32xf32>
    %238 = arith.truncf %237 : vector<64x32xf32> to vector<64x32xbf16>
    %c0_79 = arith.constant 0 : index
    %c0_80 = arith.constant 0 : index
    %239 = vector.load %arg5[%c0_79, %c0_80] : memref<32x128xbf16, #tpu.memory_space<vmem>>, vector<32x128xbf16>
    %cst_81 = arith.constant dense<0.000000e+00> : vector<64x128xf32>
    %240 = tpu.matmul %238, %239, %cst_81 {dimension_numbers = #tpu.dot_dimension_numbers<[1], [0], [0], [1], [0, 0, 1, 1], [], []>} : vector<64x32xbf16>, vector<32x128xbf16>, vector<64x128xf32> -> vector<64x128xf32>
    %c0_82 = arith.constant 0 : index
    %c0_83 = arith.constant 0 : index
    %241 = vector.load %arg7[%c0_82, %c0_83] : memref<1x128xf32, #tpu.memory_space<vmem>>, vector<1x128xf32>
    %242 = vector.broadcast %241 : vector<1x128xf32> to vector<64x128xf32>
    %243 = arith.addf %240, %242 : vector<64x128xf32>
    %244 = vector.shape_cast %243 : vector<64x128xf32> to vector<8x8x128xf32>
    %c0_84 = arith.constant 0 : index
    %c0_85 = arith.constant 0 : index
    %c0_86 = arith.constant 0 : index
    %245 = vector.load %arg11[%c0_84, %c0_85, %c0_86] : memref<8x8x128xf32, #tpu.memory_space<vmem>>, vector<8x8x128xf32>
    tpu.vector_store %arg11[%c0_84, %c0_85, %c0_86], %244 {strides = array<i32>} : memref<8x8x128xf32, #tpu.memory_space<vmem>>, vector<8x8x128xf32>,
    %c0_87 = arith.constant 0 : index
    %c0_88 = arith.constant 0 : index
    %246 = vector.load %arg6[%c0_87, %c0_88] : memref<32x128xbf16, #tpu.memory_space<vmem>>, vector<32x128xbf16>
    %cst_89 = arith.constant 0.000000e+00 : f32
    %247 = vector.broadcast %cst_89 : f32 to vector<8x32xf32>
    %c0_i32_90 = arith.constant 0 : i32
    %248 = arith.index_cast %c0_i32_90 : i32 to index
    %c0_91 = arith.constant 0 : index
    %c0_92 = arith.constant 0 : index
    %249 = vector.load %arg11[%248, %c0_91, %c0_92] : memref<8x8x128xf32, #tpu.memory_space<vmem>>, vector<1x8x128xf32>
    %250 = vector.shape_cast %249 : vector<1x8x128xf32> to vector<8x128xf32>
    %251 = arith.truncf %247 : vector<8x32xf32> to vector<8x32xbf16>
    %cst_93 = arith.constant dense<0.000000e+00> : vector<8x128xf32>
    %252 = tpu.matmul %251, %246, %cst_93 {dimension_numbers = #tpu.dot_dimension_numbers<[1], [0], [0], [1], [0, 0, 1, 1], [], []>} : vector<8x32xbf16>, vector<32x128xbf16>, vector<8x128xf32> -> vector<8x128xf32>
    %253 = arith.addf %250, %252 : vector<8x128xf32>
    %254 = vector.extract_strided_slice %253 {offsets = [0, 0], sizes = [8, 96], strides = [1, 1]} : vector<8x128xf32> to vector<8x96xf32>
    %cst_94 = arith.constant 5.000000e-01 : f32
    %255 = vector.broadcast %cst_94 : f32 to vector<8x96xf32>
    %256 = arith.mulf %255, %254 : vector<8x96xf32>
    %257 = math.tanh %256 : vector<8x96xf32>
    %cst_95 = arith.constant 5.000000e-01 : f32
    %258 = vector.broadcast %cst_95 : f32 to vector<8x96xf32>
    %259 = arith.mulf %258, %257 : vector<8x96xf32>
    %cst_96 = arith.constant 5.000000e-01 : f32
    %260 = vector.broadcast %cst_96 : f32 to vector<8x96xf32>
    %261 = arith.addf %259, %260 : vector<8x96xf32>
    %262 = vector.extract_strided_slice %253 {offsets = [0, 96], sizes = [8, 32], strides = [1, 1]} : vector<8x128xf32> to vector<8x32xf32>
    %263 = math.tanh %262 : vector<8x32xf32>
    %264 = vector.extract_strided_slice %261 {offsets = [0, 32], sizes = [8, 32], strides = [1, 1]} : vector<8x96xf32> to vector<8x32xf32>
    %265 = arith.mulf %264, %247 : vector<8x32xf32>
    %266 = vector.extract_strided_slice %261 {offsets = [0, 0], sizes = [8, 32], strides = [1, 1]} : vector<8x96xf32> to vector<8x32xf32>
    %267 = arith.mulf %266, %263 : vector<8x32xf32>
    %268 = arith.addf %265, %267 : vector<8x32xf32>
    %269 = vector.extract_strided_slice %261 {offsets = [0, 64], sizes = [8, 32], strides = [1, 1]} : vector<8x96xf32> to vector<8x32xf32>
    %270 = math.tanh %268 : vector<8x32xf32>
    %271 = arith.mulf %269, %270 : vector<8x32xf32>
    %c1_i32_97 = arith.constant 1 : i32
    %272 = arith.index_cast %c1_i32_97 : i32 to index
    %c0_98 = arith.constant 0 : index
    %c0_99 = arith.constant 0 : index
    %273 = vector.load %arg11[%272, %c0_98, %c0_99] : memref<8x8x128xf32, #tpu.memory_space<vmem>>, vector<1x8x128xf32>
    %274 = vector.shape_cast %273 : vector<1x8x128xf32> to vector<8x128xf32>
    %275 = arith.truncf %271 : vector<8x32xf32> to vector<8x32xbf16>
    %cst_100 = arith.constant dense<0.000000e+00> : vector<8x128xf32>
    %276 = tpu.matmul %275, %246, %cst_100 {dimension_numbers = #tpu.dot_dimension_numbers<[1], [0], [0], [1], [0, 0, 1, 1], [], []>} : vector<8x32xbf16>, vector<32x128xbf16>, vector<8x128xf32> -> vector<8x128xf32>
    %277 = arith.addf %274, %276 : vector<8x128xf32>
    %278 = vector.extract_strided_slice %277 {offsets = [0, 0], sizes = [8, 96], strides = [1, 1]} : vector<8x128xf32> to vector<8x96xf32>
    %cst_101 = arith.constant 5.000000e-01 : f32
    %279 = vector.broadcast %cst_101 : f32 to vector<8x96xf32>
    %280 = arith.mulf %279, %278 : vector<8x96xf32>
    %281 = math.tanh %280 : vector<8x96xf32>
    %cst_102 = arith.constant 5.000000e-01 : f32
    %282 = vector.broadcast %cst_102 : f32 to vector<8x96xf32>
    %283 = arith.mulf %282, %281 : vector<8x96xf32>
    %cst_103 = arith.constant 5.000000e-01 : f32
    %284 = vector.broadcast %cst_103 : f32 to vector<8x96xf32>
    %285 = arith.addf %283, %284 : vector<8x96xf32>
    %286 = vector.extract_strided_slice %277 {offsets = [0, 96], sizes = [8, 32], strides = [1, 1]} : vector<8x128xf32> to vector<8x32xf32>
    %287 = math.tanh %286 : vector<8x32xf32>
    %288 = vector.extract_strided_slice %285 {offsets = [0, 32], sizes = [8, 32], strides = [1, 1]} : vector<8x96xf32> to vector<8x32xf32>
    %289 = arith.mulf %288, %268 : vector<8x32xf32>
    %290 = vector.extract_strided_slice %285 {offsets = [0, 0], sizes = [8, 32], strides = [1, 1]} : vector<8x96xf32> to vector<8x32xf32>
    %291 = arith.mulf %290, %287 : vector<8x32xf32>
    %292 = arith.addf %289, %291 : vector<8x32xf32>
    %293 = vector.extract_strided_slice %285 {offsets = [0, 64], sizes = [8, 32], strides = [1, 1]} : vector<8x96xf32> to vector<8x32xf32>
    %294 = math.tanh %292 : vector<8x32xf32>
    %295 = arith.mulf %293, %294 : vector<8x32xf32>
    %c2_i32_104 = arith.constant 2 : i32
    %296 = arith.index_cast %c2_i32_104 : i32 to index
    %c0_105 = arith.constant 0 : index
    %c0_106 = arith.constant 0 : index
    %297 = vector.load %arg11[%296, %c0_105, %c0_106] : memref<8x8x128xf32, #tpu.memory_space<vmem>>, vector<1x8x128xf32>
    %298 = vector.shape_cast %297 : vector<1x8x128xf32> to vector<8x128xf32>
    %299 = arith.truncf %295 : vector<8x32xf32> to vector<8x32xbf16>
    %cst_107 = arith.constant dense<0.000000e+00> : vector<8x128xf32>
    %300 = tpu.matmul %299, %246, %cst_107 {dimension_numbers = #tpu.dot_dimension_numbers<[1], [0], [0], [1], [0, 0, 1, 1], [], []>} : vector<8x32xbf16>, vector<32x128xbf16>, vector<8x128xf32> -> vector<8x128xf32>
    %301 = arith.addf %298, %300 : vector<8x128xf32>
    %302 = vector.extract_strided_slice %301 {offsets = [0, 0], sizes = [8, 96], strides = [1, 1]} : vector<8x128xf32> to vector<8x96xf32>
    %cst_108 = arith.constant 5.000000e-01 : f32
    %303 = vector.broadcast %cst_108 : f32 to vector<8x96xf32>
    %304 = arith.mulf %303, %302 : vector<8x96xf32>
    %305 = math.tanh %304 : vector<8x96xf32>
    %cst_109 = arith.constant 5.000000e-01 : f32
    %306 = vector.broadcast %cst_109 : f32 to vector<8x96xf32>
    %307 = arith.mulf %306, %305 : vector<8x96xf32>
    %cst_110 = arith.constant 5.000000e-01 : f32
    %308 = vector.broadcast %cst_110 : f32 to vector<8x96xf32>
    %309 = arith.addf %307, %308 : vector<8x96xf32>
    %310 = vector.extract_strided_slice %301 {offsets = [0, 96], sizes = [8, 32], strides = [1, 1]} : vector<8x128xf32> to vector<8x32xf32>
    %311 = math.tanh %310 : vector<8x32xf32>
    %312 = vector.extract_strided_slice %309 {offsets = [0, 32], sizes = [8, 32], strides = [1, 1]} : vector<8x96xf32> to vector<8x32xf32>
    %313 = arith.mulf %312, %292 : vector<8x32xf32>
    %314 = vector.extract_strided_slice %309 {offsets = [0, 0], sizes = [8, 32], strides = [1, 1]} : vector<8x96xf32> to vector<8x32xf32>
    %315 = arith.mulf %314, %311 : vector<8x32xf32>
    %316 = arith.addf %313, %315 : vector<8x32xf32>
    %317 = vector.extract_strided_slice %309 {offsets = [0, 64], sizes = [8, 32], strides = [1, 1]} : vector<8x96xf32> to vector<8x32xf32>
    %318 = math.tanh %316 : vector<8x32xf32>
    %319 = arith.mulf %317, %318 : vector<8x32xf32>
    %c3_i32_111 = arith.constant 3 : i32
    %320 = arith.index_cast %c3_i32_111 : i32 to index
    %c0_112 = arith.constant 0 : index
    %c0_113 = arith.constant 0 : index
    %321 = vector.load %arg11[%320, %c0_112, %c0_113] : memref<8x8x128xf32, #tpu.memory_space<vmem>>, vector<1x8x128xf32>
    %322 = vector.shape_cast %321 : vector<1x8x128xf32> to vector<8x128xf32>
    %323 = arith.truncf %319 : vector<8x32xf32> to vector<8x32xbf16>
    %cst_114 = arith.constant dense<0.000000e+00> : vector<8x128xf32>
    %324 = tpu.matmul %323, %246, %cst_114 {dimension_numbers = #tpu.dot_dimension_numbers<[1], [0], [0], [1], [0, 0, 1, 1], [], []>} : vector<8x32xbf16>, vector<32x128xbf16>, vector<8x128xf32> -> vector<8x128xf32>
    %325 = arith.addf %322, %324 : vector<8x128xf32>
    %326 = vector.extract_strided_slice %325 {offsets = [0, 0], sizes = [8, 96], strides = [1, 1]} : vector<8x128xf32> to vector<8x96xf32>
    %cst_115 = arith.constant 5.000000e-01 : f32
    %327 = vector.broadcast %cst_115 : f32 to vector<8x96xf32>
    %328 = arith.mulf %327, %326 : vector<8x96xf32>
    %329 = math.tanh %328 : vector<8x96xf32>
    %cst_116 = arith.constant 5.000000e-01 : f32
    %330 = vector.broadcast %cst_116 : f32 to vector<8x96xf32>
    %331 = arith.mulf %330, %329 : vector<8x96xf32>
    %cst_117 = arith.constant 5.000000e-01 : f32
    %332 = vector.broadcast %cst_117 : f32 to vector<8x96xf32>
    %333 = arith.addf %331, %332 : vector<8x96xf32>
    %334 = vector.extract_strided_slice %325 {offsets = [0, 96], sizes = [8, 32], strides = [1, 1]} : vector<8x128xf32> to vector<8x32xf32>
    %335 = math.tanh %334 : vector<8x32xf32>
    %336 = vector.extract_strided_slice %333 {offsets = [0, 32], sizes = [8, 32], strides = [1, 1]} : vector<8x96xf32> to vector<8x32xf32>
    %337 = arith.mulf %336, %316 : vector<8x32xf32>
    %338 = vector.extract_strided_slice %333 {offsets = [0, 0], sizes = [8, 32], strides = [1, 1]} : vector<8x96xf32> to vector<8x32xf32>
    %339 = arith.mulf %338, %335 : vector<8x32xf32>
    %340 = arith.addf %337, %339 : vector<8x32xf32>
    %341 = vector.extract_strided_slice %333 {offsets = [0, 64], sizes = [8, 32], strides = [1, 1]} : vector<8x96xf32> to vector<8x32xf32>
    %342 = math.tanh %340 : vector<8x32xf32>
    %343 = arith.mulf %341, %342 : vector<8x32xf32>
    %c4_i32_118 = arith.constant 4 : i32
    %344 = arith.index_cast %c4_i32_118 : i32 to index
    %c0_119 = arith.constant 0 : index
    %c0_120 = arith.constant 0 : index
    %345 = vector.load %arg11[%344, %c0_119, %c0_120] : memref<8x8x128xf32, #tpu.memory_space<vmem>>, vector<1x8x128xf32>
    %346 = vector.shape_cast %345 : vector<1x8x128xf32> to vector<8x128xf32>
    %347 = arith.truncf %343 : vector<8x32xf32> to vector<8x32xbf16>
    %cst_121 = arith.constant dense<0.000000e+00> : vector<8x128xf32>
    %348 = tpu.matmul %347, %246, %cst_121 {dimension_numbers = #tpu.dot_dimension_numbers<[1], [0], [0], [1], [0, 0, 1, 1], [], []>} : vector<8x32xbf16>, vector<32x128xbf16>, vector<8x128xf32> -> vector<8x128xf32>
    %349 = arith.addf %346, %348 : vector<8x128xf32>
    %350 = vector.extract_strided_slice %349 {offsets = [0, 0], sizes = [8, 96], strides = [1, 1]} : vector<8x128xf32> to vector<8x96xf32>
    %cst_122 = arith.constant 5.000000e-01 : f32
    %351 = vector.broadcast %cst_122 : f32 to vector<8x96xf32>
    %352 = arith.mulf %351, %350 : vector<8x96xf32>
    %353 = math.tanh %352 : vector<8x96xf32>
    %cst_123 = arith.constant 5.000000e-01 : f32
    %354 = vector.broadcast %cst_123 : f32 to vector<8x96xf32>
    %355 = arith.mulf %354, %353 : vector<8x96xf32>
    %cst_124 = arith.constant 5.000000e-01 : f32
    %356 = vector.broadcast %cst_124 : f32 to vector<8x96xf32>
    %357 = arith.addf %355, %356 : vector<8x96xf32>
    %358 = vector.extract_strided_slice %349 {offsets = [0, 96], sizes = [8, 32], strides = [1, 1]} : vector<8x128xf32> to vector<8x32xf32>
    %359 = math.tanh %358 : vector<8x32xf32>
    %360 = vector.extract_strided_slice %357 {offsets = [0, 32], sizes = [8, 32], strides = [1, 1]} : vector<8x96xf32> to vector<8x32xf32>
    %361 = arith.mulf %360, %340 : vector<8x32xf32>
    %362 = vector.extract_strided_slice %357 {offsets = [0, 0], sizes = [8, 32], strides = [1, 1]} : vector<8x96xf32> to vector<8x32xf32>
    %363 = arith.mulf %362, %359 : vector<8x32xf32>
    %364 = arith.addf %361, %363 : vector<8x32xf32>
    %365 = vector.extract_strided_slice %357 {offsets = [0, 64], sizes = [8, 32], strides = [1, 1]} : vector<8x96xf32> to vector<8x32xf32>
    %366 = math.tanh %364 : vector<8x32xf32>
    %367 = arith.mulf %365, %366 : vector<8x32xf32>
    %c5_i32_125 = arith.constant 5 : i32
    %368 = arith.index_cast %c5_i32_125 : i32 to index
    %c0_126 = arith.constant 0 : index
    %c0_127 = arith.constant 0 : index
    %369 = vector.load %arg11[%368, %c0_126, %c0_127] : memref<8x8x128xf32, #tpu.memory_space<vmem>>, vector<1x8x128xf32>
    %370 = vector.shape_cast %369 : vector<1x8x128xf32> to vector<8x128xf32>
    %371 = arith.truncf %367 : vector<8x32xf32> to vector<8x32xbf16>
    %cst_128 = arith.constant dense<0.000000e+00> : vector<8x128xf32>
    %372 = tpu.matmul %371, %246, %cst_128 {dimension_numbers = #tpu.dot_dimension_numbers<[1], [0], [0], [1], [0, 0, 1, 1], [], []>} : vector<8x32xbf16>, vector<32x128xbf16>, vector<8x128xf32> -> vector<8x128xf32>
    %373 = arith.addf %370, %372 : vector<8x128xf32>
    %374 = vector.extract_strided_slice %373 {offsets = [0, 0], sizes = [8, 96], strides = [1, 1]} : vector<8x128xf32> to vector<8x96xf32>
    %cst_129 = arith.constant 5.000000e-01 : f32
    %375 = vector.broadcast %cst_129 : f32 to vector<8x96xf32>
    %376 = arith.mulf %375, %374 : vector<8x96xf32>
    %377 = math.tanh %376 : vector<8x96xf32>
    %cst_130 = arith.constant 5.000000e-01 : f32
    %378 = vector.broadcast %cst_130 : f32 to vector<8x96xf32>
    %379 = arith.mulf %378, %377 : vector<8x96xf32>
    %cst_131 = arith.constant 5.000000e-01 : f32
    %380 = vector.broadcast %cst_131 : f32 to vector<8x96xf32>
    %381 = arith.addf %379, %380 : vector<8x96xf32>
    %382 = vector.extract_strided_slice %373 {offsets = [0, 96], sizes = [8, 32], strides = [1, 1]} : vector<8x128xf32> to vector<8x32xf32>
    %383 = math.tanh %382 : vector<8x32xf32>
    %384 = vector.extract_strided_slice %381 {offsets = [0, 32], sizes = [8, 32], strides = [1, 1]} : vector<8x96xf32> to vector<8x32xf32>
    %385 = arith.mulf %384, %364 : vector<8x32xf32>
    %386 = vector.extract_strided_slice %381 {offsets = [0, 0], sizes = [8, 32], strides = [1, 1]} : vector<8x96xf32> to vector<8x32xf32>
    %387 = arith.mulf %386, %383 : vector<8x32xf32>
    %388 = arith.addf %385, %387 : vector<8x32xf32>
    %389 = vector.extract_strided_slice %381 {offsets = [0, 64], sizes = [8, 32], strides = [1, 1]} : vector<8x96xf32> to vector<8x32xf32>
    %390 = math.tanh %388 : vector<8x32xf32>
    %391 = arith.mulf %389, %390 : vector<8x32xf32>
    %c6_i32_132 = arith.constant 6 : i32
    %392 = arith.index_cast %c6_i32_132 : i32 to index
    %c0_133 = arith.constant 0 : index
    %c0_134 = arith.constant 0 : index
    %393 = vector.load %arg11[%392, %c0_133, %c0_134] : memref<8x8x128xf32, #tpu.memory_space<vmem>>, vector<1x8x128xf32>
    %394 = vector.shape_cast %393 : vector<1x8x128xf32> to vector<8x128xf32>
    %395 = arith.truncf %391 : vector<8x32xf32> to vector<8x32xbf16>
    %cst_135 = arith.constant dense<0.000000e+00> : vector<8x128xf32>
    %396 = tpu.matmul %395, %246, %cst_135 {dimension_numbers = #tpu.dot_dimension_numbers<[1], [0], [0], [1], [0, 0, 1, 1], [], []>} : vector<8x32xbf16>, vector<32x128xbf16>, vector<8x128xf32> -> vector<8x128xf32>
    %397 = arith.addf %394, %396 : vector<8x128xf32>
    %398 = vector.extract_strided_slice %397 {offsets = [0, 0], sizes = [8, 96], strides = [1, 1]} : vector<8x128xf32> to vector<8x96xf32>
    %cst_136 = arith.constant 5.000000e-01 : f32
    %399 = vector.broadcast %cst_136 : f32 to vector<8x96xf32>
    %400 = arith.mulf %399, %398 : vector<8x96xf32>
    %401 = math.tanh %400 : vector<8x96xf32>
    %cst_137 = arith.constant 5.000000e-01 : f32
    %402 = vector.broadcast %cst_137 : f32 to vector<8x96xf32>
    %403 = arith.mulf %402, %401 : vector<8x96xf32>
    %cst_138 = arith.constant 5.000000e-01 : f32
    %404 = vector.broadcast %cst_138 : f32 to vector<8x96xf32>
    %405 = arith.addf %403, %404 : vector<8x96xf32>
    %406 = vector.extract_strided_slice %397 {offsets = [0, 96], sizes = [8, 32], strides = [1, 1]} : vector<8x128xf32> to vector<8x32xf32>
    %407 = math.tanh %406 : vector<8x32xf32>
    %408 = vector.extract_strided_slice %405 {offsets = [0, 32], sizes = [8, 32], strides = [1, 1]} : vector<8x96xf32> to vector<8x32xf32>
    %409 = arith.mulf %408, %388 : vector<8x32xf32>
    %410 = vector.extract_strided_slice %405 {offsets = [0, 0], sizes = [8, 32], strides = [1, 1]} : vector<8x96xf32> to vector<8x32xf32>
    %411 = arith.mulf %410, %407 : vector<8x32xf32>
    %412 = arith.addf %409, %411 : vector<8x32xf32>
    %413 = vector.extract_strided_slice %405 {offsets = [0, 64], sizes = [8, 32], strides = [1, 1]} : vector<8x96xf32> to vector<8x32xf32>
    %414 = math.tanh %412 : vector<8x32xf32>
    %415 = arith.mulf %413, %414 : vector<8x32xf32>
    %c7_i32_139 = arith.constant 7 : i32
    %416 = arith.index_cast %c7_i32_139 : i32 to index
    %c0_140 = arith.constant 0 : index
    %c0_141 = arith.constant 0 : index
    %417 = vector.load %arg11[%416, %c0_140, %c0_141] : memref<8x8x128xf32, #tpu.memory_space<vmem>>, vector<1x8x128xf32>
    %418 = vector.shape_cast %417 : vector<1x8x128xf32> to vector<8x128xf32>
    %419 = arith.truncf %415 : vector<8x32xf32> to vector<8x32xbf16>
    %cst_142 = arith.constant dense<0.000000e+00> : vector<8x128xf32>
    %420 = tpu.matmul %419, %246, %cst_142 {dimension_numbers = #tpu.dot_dimension_numbers<[1], [0], [0], [1], [0, 0, 1, 1], [], []>} : vector<8x32xbf16>, vector<32x128xbf16>, vector<8x128xf32> -> vector<8x128xf32>
    %421 = arith.addf %418, %420 : vector<8x128xf32>
    %422 = vector.extract_strided_slice %421 {offsets = [0, 0], sizes = [8, 96], strides = [1, 1]} : vector<8x128xf32> to vector<8x96xf32>
    %cst_143 = arith.constant 5.000000e-01 : f32
    %423 = vector.broadcast %cst_143 : f32 to vector<8x96xf32>
    %424 = arith.mulf %423, %422 : vector<8x96xf32>
    %425 = math.tanh %424 : vector<8x96xf32>
    %cst_144 = arith.constant 5.000000e-01 : f32
    %426 = vector.broadcast %cst_144 : f32 to vector<8x96xf32>
    %427 = arith.mulf %426, %425 : vector<8x96xf32>
    %cst_145 = arith.constant 5.000000e-01 : f32
    %428 = vector.broadcast %cst_145 : f32 to vector<8x96xf32>
    %429 = arith.addf %427, %428 : vector<8x96xf32>
    %430 = vector.extract_strided_slice %421 {offsets = [0, 96], sizes = [8, 32], strides = [1, 1]} : vector<8x128xf32> to vector<8x32xf32>
    %431 = math.tanh %430 : vector<8x32xf32>
    %432 = vector.extract_strided_slice %429 {offsets = [0, 32], sizes = [8, 32], strides = [1, 1]} : vector<8x96xf32> to vector<8x32xf32>
    %433 = arith.mulf %432, %412 : vector<8x32xf32>
    %434 = vector.extract_strided_slice %429 {offsets = [0, 0], sizes = [8, 32], strides = [1, 1]} : vector<8x96xf32> to vector<8x32xf32>
    %435 = arith.mulf %434, %431 : vector<8x32xf32>
    %436 = arith.addf %433, %435 : vector<8x32xf32>
    %437 = vector.extract_strided_slice %429 {offsets = [0, 64], sizes = [8, 32], strides = [1, 1]} : vector<8x96xf32> to vector<8x32xf32>
    %438 = math.tanh %436 : vector<8x32xf32>
    %439 = arith.mulf %437, %438 : vector<8x32xf32>
    %c8_i32_146 = arith.constant 8 : i32
    %c0_147 = arith.constant 0 : index
    %c0_148 = arith.constant 0 : index
    %440 = vector.load %arg8[%c0_147, %c0_148] : memref<32x4xf32, #tpu.memory_space<vmem>>, vector<32x4xf32>
    %cst_149 = arith.constant dense<0.000000e+00> : vector<8x4xf32>
    %441 = tpu.matmul %439, %440, %cst_149 {dimension_numbers = #tpu.dot_dimension_numbers<[1], [0], [0], [1], [0, 0, 1, 1], [], []>} : vector<8x32xf32>, vector<32x4xf32>, vector<8x4xf32> -> vector<8x4xf32>
    %c0_150 = arith.constant 0 : index
    %c0_151 = arith.constant 0 : index
    %442 = vector.load %arg9[%c0_150, %c0_151] : memref<1x4xf32, #tpu.memory_space<vmem>>, vector<1x4xf32>
    %443 = vector.broadcast %442 : vector<1x4xf32> to vector<8x4xf32>
    %444 = arith.addf %441, %443 : vector<8x4xf32>
    %c0_152 = arith.constant 0 : index
    %c0_153 = arith.constant 0 : index
    %445 = vector.load %arg10[%c0_152, %c0_153] : memref<8x4xf32, #tpu.memory_space<vmem>>, vector<8x4xf32>
    tpu.vector_store %arg10[%c0_152, %c0_153], %444 {strides = array<i32>} : memref<8x4xf32, #tpu.memory_space<vmem>>, vector<8x4xf32>,
    return
  }
  func.func @transform_0(%arg0: i32) -> (i32, i32, i32) {
    %c0_i32 = arith.constant 0 : i32
    %c0_i32_0 = arith.constant 0 : i32
    %c0_i32_1 = arith.constant 0 : i32
    return %c0_i32, %arg0, %c0_i32_0 : i32, i32, i32
  }
  func.func @transform_1(%arg0: i32) -> (i32, i32) {
    %c0_i32 = arith.constant 0 : i32
    %c0_i32_0 = arith.constant 0 : i32
    %c0_i32_1 = arith.constant 0 : i32
    return %c0_i32, %c0_i32_0 : i32, i32
  }
  func.func @transform_2(%arg0: i32) -> (i32, i32) {
    %c0_i32 = arith.constant 0 : i32
    %c0_i32_0 = arith.constant 0 : i32
    %c0_i32_1 = arith.constant 0 : i32
    return %c0_i32, %c0_i32_0 : i32, i32
  }
  func.func @transform_3(%arg0: i32) -> (i32, i32) {
    %c0_i32 = arith.constant 0 : i32
    %c0_i32_0 = arith.constant 0 : i32
    %c0_i32_1 = arith.constant 0 : i32
    return %c0_i32, %c0_i32_0 : i32, i32
  }
  func.func @transform_4(%arg0: i32) -> (i32, i32) {
    %c0_i32 = arith.constant 0 : i32
    %c0_i32_0 = arith.constant 0 : i32
    %c0_i32_1 = arith.constant 0 : i32
    return %c0_i32, %c0_i32_0 : i32, i32
  }
  func.func @transform_5(%arg0: i32) -> (i32, i32) {
    %c0_i32 = arith.constant 0 : i32
    %c0_i32_0 = arith.constant 0 : i32
    %c0_i32_1 = arith.constant 0 : i32
    return %c0_i32, %c0_i32_0 : i32, i32
  }
  func.func @transform_6(%arg0: i32) -> (i32, i32) {
    %c0_i32 = arith.constant 0 : i32
    %c0_i32_0 = arith.constant 0 : i32
    %c0_i32_1 = arith.constant 0 : i32
    return %c0_i32, %c0_i32_0 : i32, i32
  }
  func.func @transform_7(%arg0: i32) -> (i32, i32) {
    %c0_i32 = arith.constant 0 : i32
    %c0_i32_0 = arith.constant 0 : i32
    %c0_i32_1 = arith.constant 0 : i32
    return %c0_i32, %c0_i32_0 : i32, i32
  }
  func.func @transform_8(%arg0: i32) -> (i32, i32) {
    %c0_i32 = arith.constant 0 : i32
    %c0_i32_0 = arith.constant 0 : i32
    %c0_i32_1 = arith.constant 0 : i32
    return %c0_i32, %c0_i32_0 : i32, i32
  }
  func.func @transform_9(%arg0: i32) -> (i32, i32) {
    %c0_i32 = arith.constant 0 : i32
    %c0_i32_0 = arith.constant 0 : i32
    return %arg0, %c0_i32 : i32, i32
  }
}

</mosaic_0001>

<llo_original>
// kernel: sequential_lstm_forward.1
$region0: #{sequential_lstm_forward.1}
  #allocation0 [shape = 'u32[]', space=smem, size = 0x4, offset = 0x4, fixed_abs, tag = 'smem constant byte address 0x4 - core index']
  #allocation1 [shape = 'u32[72,128]{1,0:T(1,128)}', space=vmem, size = 0x9000, scoped, tag = 'internal scratch']
  #allocation2 [shape = 'f32[8,8,128]{2,1,0:T(8,128)}', space=vmem, size = 0x8000, scoped, tag = 'scratch operand']
  #allocation3 [shape = 'f32[8,8,32]{2,1,0:T(8,128)}', space=vmem, size = 0x8000, scoped, tag = 'scratch operand']
  %s0 = inlined_call_operand.vmem [shape: f32[8,8,16], index: 0, kind: input, shape index: {}]
  %s1 = inlined_call_operand.vmem [shape: bf16[16,128], index: 1, kind: input, shape index: {}]
  %s2 = inlined_call_operand.vmem [shape: bf16[32,128], index: 2, kind: input, shape index: {}]
  %s3 = inlined_call_operand.vmem [shape: f32[1,128], index: 3, kind: input, shape index: {}]
  %s4 = inlined_call_operand.vmem [shape: bf16[32,128], index: 4, kind: input, shape index: {}]
  %s5 = inlined_call_operand.vmem [shape: bf16[32,128], index: 5, kind: input, shape index: {}]
  %s6 = inlined_call_operand.vmem [shape: f32[1,128], index: 6, kind: input, shape index: {}]
  %s7 = inlined_call_operand.vmem [shape: f32[32,4], index: 7, kind: input, shape index: {}]
  %s8 = inlined_call_operand.vmem [shape: f32[1,4], index: 8, kind: input, shape index: {}]
  %s9 = inlined_call_operand.vmem [shape: f32[8,4], index: 9, kind: output, shape index: {}]
  %s10 = sld [smem:[#allocation0]]
  $region46: #{sequential_lstm_forward.1} parent=0
    _
  %s12 = ssub.s32 1, %s10
  %s13 = scalar_select 0, %s12, %s10
  // Predicated region
  $region2: #{sequential_lstm_forward.1} parent=0 // pred_check
    _
  $region3: #{sequential_lstm_forward.1} parent=0 // pred_check_branch
    %15 = sbr.rel (0) target = $region5
  $region4: #{sequential_lstm_forward.1} parent=0 // pred_region
    _
  $region5: #{sequential_lstm_forward.1} parent=0 // pred_fallthru
    _
  // Predicated region
  $region6: #{sequential_lstm_forward.1} parent=0 // pred_check
    _
  $region7: #{sequential_lstm_forward.1} parent=0 // pred_check_branch
    %17 = sbr.rel (0) target = $region9
  $region8: #{sequential_lstm_forward.1} parent=0 // pred_region
    _
  $region9: #{sequential_lstm_forward.1} parent=0 // pred_fallthru
    _
  // Predicated region
  $region10: #{sequential_lstm_forward.1} parent=0 // pred_check
    _
  $region11: #{sequential_lstm_forward.1} parent=0 // pred_check_branch
    %19 = sbr.rel (0) target = $region13
  $region12: #{sequential_lstm_forward.1} parent=0 // pred_region
    _
  $region13: #{sequential_lstm_forward.1} parent=0 // pred_fallthru
    _
  // Predicated region
  $region14: #{sequential_lstm_forward.1} parent=0 // pred_check
    _
  $region15: #{sequential_lstm_forward.1} parent=0 // pred_check_branch
    %21 = sbr.rel (0) target = $region17
  $region16: #{sequential_lstm_forward.1} parent=0 // pred_region
    _
  $region17: #{sequential_lstm_forward.1} parent=0 // pred_fallthru
    _
  // Predicated region
  $region18: #{sequential_lstm_forward.1} parent=0 // pred_check
    _
  $region19: #{sequential_lstm_forward.1} parent=0 // pred_check_branch
    %23 = sbr.rel (0) target = $region21
  $region20: #{sequential_lstm_forward.1} parent=0 // pred_region
    _
  $region21: #{sequential_lstm_forward.1} parent=0 // pred_fallthru
    _
  // Predicated region
  $region22: #{sequential_lstm_forward.1} parent=0 // pred_check
    _
  $region23: #{sequential_lstm_forward.1} parent=0 // pred_check_branch
    %25 = sbr.rel (0) target = $region25
  $region24: #{sequential_lstm_forward.1} parent=0 // pred_region
    _
  $region25: #{sequential_lstm_forward.1} parent=0 // pred_fallthru
    _
  // Predicated region
  $region26: #{sequential_lstm_forward.1} parent=0 // pred_check
    _
  $region27: #{sequential_lstm_forward.1} parent=0 // pred_check_branch
    %27 = sbr.rel (0) target = $region29
  $region28: #{sequential_lstm_forward.1} parent=0 // pred_region
    _
  $region29: #{sequential_lstm_forward.1} parent=0 // pred_fallthru
    _
  // Predicated region
  $region30: #{sequential_lstm_forward.1} parent=0 // pred_check
    _
  $region31: #{sequential_lstm_forward.1} parent=0 // pred_check_branch
    %29 = sbr.rel (0) target = $region33
  $region32: #{sequential_lstm_forward.1} parent=0 // pred_region
    _
  $region33: #{sequential_lstm_forward.1} parent=0 // pred_fallthru
    _
  // Predicated region
  $region34: #{sequential_lstm_forward.1} parent=0 // pred_check
    _
  $region35: #{sequential_lstm_forward.1} parent=0 // pred_check_branch
    %31 = sbr.rel (0) target = $region37
  $region36: #{sequential_lstm_forward.1} parent=0 // pred_region
    _
  $region37: #{sequential_lstm_forward.1} parent=0 // pred_fallthru
    _
  %v33 = vld [vmem:[%s0] sm:$0xff]
  %v34 = vld [vmem:[%s0 + $0x8] sm:$0xff]
  %v35 = vld [vmem:[%s0 + $0x10] sm:$0xff]
  %v36 = vld [vmem:[%s0 + $0x18] sm:$0xff]
  %v37 = vld [vmem:[%s0 + $0x20] sm:$0xff]
  %v38 = vld [vmem:[%s0 + $0x28] sm:$0xff]
  %v39 = vld [vmem:[%s0 + $0x30] sm:$0xff]
  %v40 = vld [vmem:[%s0 + $0x38] sm:$0xff]
  %v41 = vpack.c.bf16 %v34, %v33
  %v42 = vpack.c.bf16 %v36, %v35
  %v43 = vpack.c.bf16 %v38, %v37
  %v44 = vpack.c.bf16 %v40, %v39
  %v45 = vld [vmem:[%s1] sm:$0xf]
  %v46 = vld [vmem:[%s1 + $0x4] sm:$0xf]
  %v47 = vld [vmem:[%s3] sm:$0x1]
  %v49 = vperm.slane %v47, 0
  %v53 = vunpack.c.l.b16 %v45
  %v54 = vunpack.c.l.b16 %v46
  %v55 = vpack.c.b16 %v54, %v53
  %vm57 = vcmask 130048
  %v59 = vsel %vm57, %v41, 0
  %v62 = vsel %vm57, %v42, 0
  %v65 = vsel %vm57, %v43, 0
  %v68 = vsel %vm57, %v44, 0
  %70 = vmatpush.bf16.msra.mxu0 0
  %71 = vmatpush.bf16.msra.mxu0 0
  %72 = vmatpush.bf16.msra.mxu0 0
  %73 = vmatpush.bf16.msra.mxu0 0
  %74 = vmatpush.bf16.msra.mxu0 0
  %75 = vmatpush.bf16.msra.mxu0 0
  %76 = vmatpush.bf16.msra.mxu0 0
  %77 = vmatpush.bf16.msra.mxu0 %v55
  %78 = vmatmul.bf16.gmra.mxu0 %v59
  %v79 = vpop.f32.mrf.mxu0
  %v80 = vadd.f32 %v49, %v79
  %v81 = vpop.f32.mrf.mxu0
  %v82 = vadd.f32 %v49, %v81
  %83 = vmatmul.bf16.gmra.mxu0 %v62
  %v84 = vpop.f32.mrf.mxu0
  %v85 = vadd.f32 %v49, %v84
  %v86 = vpop.f32.mrf.mxu0
  %v87 = vadd.f32 %v49, %v86
  %88 = vmatmul.bf16.gmra.mxu0 %v65
  %v89 = vpop.f32.mrf.mxu0
  %v90 = vadd.f32 %v49, %v89
  %v91 = vpop.f32.mrf.mxu0
  %v92 = vadd.f32 %v49, %v91
  %93 = vmatmul.bf16.gmra.mxu0 %v68
  %v94 = vpop.f32.mrf.mxu0
  %v95 = vadd.f32 %v49, %v94
  %v96 = vpop.f32.mrf.mxu0
  %v97 = vadd.f32 %v49, %v96
  %98 = vdwg.mxu0
  %99 = vst [vmem:[#allocation2] sm:$0xff] %v80
  %100 = vst [vmem:[#allocation2 + $0x8] sm:$0xff] %v82
  %101 = vst [vmem:[#allocation2 + $0x10] sm:$0xff] %v85
  %102 = vst [vmem:[#allocation2 + $0x18] sm:$0xff] %v87
  %103 = vst [vmem:[#allocation2 + $0x20] sm:$0xff] %v90
  %104 = vst [vmem:[#allocation2 + $0x28] sm:$0xff] %v92
  %105 = vst [vmem:[#allocation2 + $0x30] sm:$0xff] %v95
  %106 = vst [vmem:[#allocation2 + $0x38] sm:$0xff] %v97
  %v107 = vld [vmem:[%s2] sm:$0xf]
  %v108 = vld [vmem:[%s2 + $0x4] sm:$0xf]
  %v109 = vld [vmem:[%s2 + $0x8] sm:$0xf]
  %v110 = vld [vmem:[%s2 + $0xc] sm:$0xf]
  %v111 = vld [vmem:[#allocation2] sm:$0xff]
  %v116 = vunpack.c.l.b16 %v107
  %v117 = vunpack.c.l.b16 %v108
  %v118 = vunpack.c.l.b16 %v109
  %v119 = vunpack.c.l.b16 %v110
  %v120 = vpack.c.b16 %v117, %v116
  %v121 = vpack.c.b16 %v119, %v118
  %vm124 = vcmask 261120
  %v126 = vsel %vm124, 0, 0
  %128 = vmatpush.bf16.msra.mxu0 0
  %129 = vmatpush.bf16.msra.mxu0 0
  %130 = vmatpush.bf16.msra.mxu0 0
  %131 = vmatpush.bf16.msra.mxu0 0
  %132 = vmatpush.bf16.msra.mxu0 0
  %133 = vmatpush.bf16.msra.mxu0 0
  %134 = vmatpush.bf16.msra.mxu0 %v121
  %135 = vmatpush.bf16.msra.mxu0 %v120
  %136 = vmatmul.bf16.gmra.mxu0 %v126
  %v137 = vpop.f32.mrf.mxu0
  %v138 = vadd.f32 0.0, %v137
  %v139 = vpop.f32.mrf.mxu0
  %140 = vdwg.mxu0
  %v141 = vadd.f32 %v111, %v138
  %v142 = vmul.f32 %v141, 0.5
  %v143 = vtanh.pop %v142
  %v144 = vmul.f32 %v143, 0.5
  %v145 = vadd.f32 %v144, 0.5
  %v146 = vtanh.pop %v141
  %v147 = vmul.f32 %v145, 0.0
  %149 = vrot.lane.b32.xlu0 %v146, 32
  %v150 = vpop.permute.xlu0 %149
  %v152 = vmul.f32 %v145, %v150
  %154 = vrot.lane.b32.xlu0 %v152, 32
  %v155 = vpop.permute.xlu0 %154
  %v157 = vadd.f32 %v147, %v155
  %v158 = vtanh.pop %v157
  %160 = vrot.lane.b32.xlu0 %v158, 32
  %v161 = vpop.permute.xlu0 %160
  %v163 = vmul.f32 %v145, %v161
  %165 = vrot.lane.b32.xlu0 %v163, 64
  %v166 = vpop.permute.xlu0 %165
  %168 = vst.msk [vmem:[#allocation3] sm:$0xff] %vm124, %v166
  %s169 = scalar_lea.vmem [#allocation2], 8
  %v170 = vld [vmem:[%s169] sm:$0xff]
  %v171 = vpack.c.bf16 %v163, %v163
  %173 = vrot.lane.b32.xlu0 %v171, 64
  %v174 = vpop.permute.xlu0 %173
  %v176 = vsel %vm124, %v174, 0
  %178 = vmatpush.bf16.msra.mxu0 0
  %179 = vmatpush.bf16.msra.mxu0 0
  %180 = vmatpush.bf16.msra.mxu0 0
  %181 = vmatpush.bf16.msra.mxu0 0
  %182 = vmatpush.bf16.msra.mxu0 0
  %183 = vmatpush.bf16.msra.mxu0 0
  %184 = vmatpush.bf16.msra.mxu0 %v121
  %185 = vmatpush.bf16.msra.mxu0 %v120
  %186 = vmatmul.bf16.gmra.mxu0 %v176
  %v187 = vpop.f32.mrf.mxu0
  %v188 = vadd.f32 0.0, %v187
  %v189 = vpop.f32.mrf.mxu0
  %190 = vdwg.mxu0
  %v191 = vadd.f32 %v170, %v188
  %v192 = vmul.f32 %v191, 0.5
  %v193 = vtanh.pop %v192
  %v194 = vmul.f32 %v193, 0.5
  %v195 = vadd.f32 %v194, 0.5
  %v196 = vtanh.pop %v191
  %v197 = vmul.f32 %v195, %v157
  %199 = vrot.lane.b32.xlu0 %v196, 32
  %v200 = vpop.permute.xlu0 %199
  %v202 = vmul.f32 %v195, %v200
  %204 = vrot.lane.b32.xlu0 %v202, 32
  %v205 = vpop.permute.xlu0 %204
  %v207 = vadd.f32 %v197, %v205
  %v208 = vtanh.pop %v207
  %210 = vrot.lane.b32.xlu0 %v208, 32
  %v211 = vpop.permute.xlu0 %210
  %v213 = vmul.f32 %v195, %v211
  %215 = vrot.lane.b32.xlu0 %v213, 64
  %v216 = vpop.permute.xlu0 %215
  %s218 = scalar_lea.vmem [#allocation3], 8
  %219 = vst.msk [vmem:[%s218] sm:$0xff] %vm124, %v216
  %s220 = scalar_lea.vmem [#allocation2], 16
  %v221 = vld [vmem:[%s220] sm:$0xff]
  %v222 = vpack.c.bf16 %v213, %v213
  %224 = vrot.lane.b32.xlu0 %v222, 64
  %v225 = vpop.permute.xlu0 %224
  %v227 = vsel %vm124, %v225, 0
  %229 = vmatpush.bf16.msra.mxu0 0
  %230 = vmatpush.bf16.msra.mxu0 0
  %231 = vmatpush.bf16.msra.mxu0 0
  %232 = vmatpush.bf16.msra.mxu0 0
  %233 = vmatpush.bf16.msra.mxu0 0
  %234 = vmatpush.bf16.msra.mxu0 0
  %235 = vmatpush.bf16.msra.mxu0 %v121
  %236 = vmatpush.bf16.msra.mxu0 %v120
  %237 = vmatmul.bf16.gmra.mxu0 %v227
  %v238 = vpop.f32.mrf.mxu0
  %v239 = vadd.f32 0.0, %v238
  %v240 = vpop.f32.mrf.mxu0
  %241 = vdwg.mxu0
  %v242 = vadd.f32 %v221, %v239
  %v243 = vmul.f32 %v242, 0.5
  %v244 = vtanh.pop %v243
  %v245 = vmul.f32 %v244, 0.5
  %v246 = vadd.f32 %v245, 0.5
  %v247 = vtanh.pop %v242
  %v248 = vmul.f32 %v246, %v207
  %250 = vrot.lane.b32.xlu0 %v247, 32
  %v251 = vpop.permute.xlu0 %250
  %v253 = vmul.f32 %v246, %v251
  %255 = vrot.lane.b32.xlu0 %v253, 32
  %v256 = vpop.permute.xlu0 %255
  %v258 = vadd.f32 %v248, %v256
  %v259 = vtanh.pop %v258
  %261 = vrot.lane.b32.xlu0 %v259, 32
  %v262 = vpop.permute.xlu0 %261
  %v264 = vmul.f32 %v246, %v262
  %266 = vrot.lane.b32.xlu0 %v264, 64
  %v267 = vpop.permute.xlu0 %266
  %s269 = scalar_lea.vmem [#allocation3], 16
  %270 = vst.msk [vmem:[%s269] sm:$0xff] %vm124, %v267
  %s271 = scalar_lea.vmem [#allocation2], 24
  %v272 = vld [vmem:[%s271] sm:$0xff]
  %v273 = vpack.c.bf16 %v264, %v264
  %275 = vrot.lane.b32.xlu0 %v273, 64
  %v276 = vpop.permute.xlu0 %275
  %v278 = vsel %vm124, %v276, 0
  %280 = vmatpush.bf16.msra.mxu0 0
  %281 = vmatpush.bf16.msra.mxu0 0
  %282 = vmatpush.bf16.msra.mxu0 0
  %283 = vmatpush.bf16.msra.mxu0 0
  %284 = vmatpush.bf16.msra.mxu0 0
  %285 = vmatpush.bf16.msra.mxu0 0
  %286 = vmatpush.bf16.msra.mxu0 %v121
  %287 = vmatpush.bf16.msra.mxu0 %v120
  %288 = vmatmul.bf16.gmra.mxu0 %v278
  %v289 = vpop.f32.mrf.mxu0
  %v290 = vadd.f32 0.0, %v289
  %v291 = vpop.f32.mrf.mxu0
  %292 = vdwg.mxu0
  %v293 = vadd.f32 %v272, %v290
  %v294 = vmul.f32 %v293, 0.5
  %v295 = vtanh.pop %v294
  %v296 = vmul.f32 %v295, 0.5
  %v297 = vadd.f32 %v296, 0.5
  %v298 = vtanh.pop %v293
  %v299 = vmul.f32 %v297, %v258
  %301 = vrot.lane.b32.xlu0 %v298, 32
  %v302 = vpop.permute.xlu0 %301
  %v304 = vmul.f32 %v297, %v302
  %306 = vrot.lane.b32.xlu0 %v304, 32
  %v307 = vpop.permute.xlu0 %306
  %v309 = vadd.f32 %v299, %v307
  %v310 = vtanh.pop %v309
  %312 = vrot.lane.b32.xlu0 %v310, 32
  %v313 = vpop.permute.xlu0 %312
  %v315 = vmul.f32 %v297, %v313
  %317 = vrot.lane.b32.xlu0 %v315, 64
  %v318 = vpop.permute.xlu0 %317
  %s320 = scalar_lea.vmem [#allocation3], 24
  %321 = vst.msk [vmem:[%s320] sm:$0xff] %vm124, %v318
  %s322 = scalar_lea.vmem [#allocation2], 32
  %v323 = vld [vmem:[%s322] sm:$0xff]
  %v324 = vpack.c.bf16 %v315, %v315
  %326 = vrot.lane.b32.xlu0 %v324, 64
  %v327 = vpop.permute.xlu0 %326
  %v329 = vsel %vm124, %v327, 0
  %331 = vmatpush.bf16.msra.mxu0 0
  %332 = vmatpush.bf16.msra.mxu0 0
  %333 = vmatpush.bf16.msra.mxu0 0
  %334 = vmatpush.bf16.msra.mxu0 0
  %335 = vmatpush.bf16.msra.mxu0 0
  %336 = vmatpush.bf16.msra.mxu0 0
  %337 = vmatpush.bf16.msra.mxu0 %v121
  %338 = vmatpush.bf16.msra.mxu0 %v120
  %339 = vmatmul.bf16.gmra.mxu0 %v329
  %v340 = vpop.f32.mrf.mxu0
  %v341 = vadd.f32 0.0, %v340
  %v342 = vpop.f32.mrf.mxu0
  %343 = vdwg.mxu0
  %v344 = vadd.f32 %v323, %v341
  %v345 = vmul.f32 %v344, 0.5
  %v346 = vtanh.pop %v345
  %v347 = vmul.f32 %v346, 0.5
  %v348 = vadd.f32 %v347, 0.5
  %v349 = vtanh.pop %v344
  %v350 = vmul.f32 %v348, %v309
  %352 = vrot.lane.b32.xlu0 %v349, 32
  %v353 = vpop.permute.xlu0 %352
  %v355 = vmul.f32 %v348, %v353
  %357 = vrot.lane.b32.xlu0 %v355, 32
  %v358 = vpop.permute.xlu0 %357
  %v360 = vadd.f32 %v350, %v358
  %v361 = vtanh.pop %v360
  %363 = vrot.lane.b32.xlu0 %v361, 32
  %v364 = vpop.permute.xlu0 %363
  %v366 = vmul.f32 %v348, %v364
  %368 = vrot.lane.b32.xlu0 %v366, 64
  %v369 = vpop.permute.xlu0 %368
  %s371 = scalar_lea.vmem [#allocation3], 32
  %372 = vst.msk [vmem:[%s371] sm:$0xff] %vm124, %v369
  %s373 = scalar_lea.vmem [#allocation2], 40
  %v374 = vld [vmem:[%s373] sm:$0xff]
  %v375 = vpack.c.bf16 %v366, %v366
  %377 = vrot.lane.b32.xlu0 %v375, 64
  %v378 = vpop.permute.xlu0 %377
  %v380 = vsel %vm124, %v378, 0
  %382 = vmatpush.bf16.msra.mxu0 0
  %383 = vmatpush.bf16.msra.mxu0 0
  %384 = vmatpush.bf16.msra.mxu0 0
  %385 = vmatpush.bf16.msra.mxu0 0
  %386 = vmatpush.bf16.msra.mxu0 0
  %387 = vmatpush.bf16.msra.mxu0 0
  %388 = vmatpush.bf16.msra.mxu0 %v121
  %389 = vmatpush.bf16.msra.mxu0 %v120
  %390 = vmatmul.bf16.gmra.mxu0 %v380
  %v391 = vpop.f32.mrf.mxu0
  %v392 = vadd.f32 0.0, %v391
  %v393 = vpop.f32.mrf.mxu0
  %394 = vdwg.mxu0
  %v395 = vadd.f32 %v374, %v392
  %v396 = vmul.f32 %v395, 0.5
  %v397 = vtanh.pop %v396
  %v398 = vmul.f32 %v397, 0.5
  %v399 = vadd.f32 %v398, 0.5
  %v400 = vtanh.pop %v395
  %v401 = vmul.f32 %v399, %v360
  %403 = vrot.lane.b32.xlu0 %v400, 32
  %v404 = vpop.permute.xlu0 %403
  %v406 = vmul.f32 %v399, %v404
  %408 = vrot.lane.b32.xlu0 %v406, 32
  %v409 = vpop.permute.xlu0 %408
  %v411 = vadd.f32 %v401, %v409
  %v412 = vtanh.pop %v411
  %414 = vrot.lane.b32.xlu0 %v412, 32
  %v415 = vpop.permute.xlu0 %414
  %v417 = vmul.f32 %v399, %v415
  %419 = vrot.lane.b32.xlu0 %v417, 64
  %v420 = vpop.permute.xlu0 %419
  %s422 = scalar_lea.vmem [#allocation3], 40
  %423 = vst.msk [vmem:[%s422] sm:$0xff] %vm124, %v420
  %s424 = scalar_lea.vmem [#allocation2], 48
  %v425 = vld [vmem:[%s424] sm:$0xff]
  %v426 = vpack.c.bf16 %v417, %v417
  %428 = vrot.lane.b32.xlu0 %v426, 64
  %v429 = vpop.permute.xlu0 %428
  %v431 = vsel %vm124, %v429, 0
  %433 = vmatpush.bf16.msra.mxu0 0
  %434 = vmatpush.bf16.msra.mxu0 0
  %435 = vmatpush.bf16.msra.mxu0 0
  %436 = vmatpush.bf16.msra.mxu0 0
  %437 = vmatpush.bf16.msra.mxu0 0
  %438 = vmatpush.bf16.msra.mxu0 0
  %439 = vmatpush.bf16.msra.mxu0 %v121
  %440 = vmatpush.bf16.msra.mxu0 %v120
  %441 = vmatmul.bf16.gmra.mxu0 %v431
  %v442 = vpop.f32.mrf.mxu0
  %v443 = vadd.f32 0.0, %v442
  %v444 = vpop.f32.mrf.mxu0
  %445 = vdwg.mxu0
  %v446 = vadd.f32 %v425, %v443
  %v447 = vmul.f32 %v446, 0.5
  %v448 = vtanh.pop %v447
  %v449 = vmul.f32 %v448, 0.5
  %v450 = vadd.f32 %v449, 0.5
  %v451 = vtanh.pop %v446
  %v452 = vmul.f32 %v450, %v411
  %454 = vrot.lane.b32.xlu0 %v451, 32
  %v455 = vpop.permute.xlu0 %454
  %v457 = vmul.f32 %v450, %v455
  %459 = vrot.lane.b32.xlu0 %v457, 32
  %v460 = vpop.permute.xlu0 %459
  %v462 = vadd.f32 %v452, %v460
  %v463 = vtanh.pop %v462
  %465 = vrot.lane.b32.xlu0 %v463, 32
  %v466 = vpop.permute.xlu0 %465
  %v468 = vmul.f32 %v450, %v466
  %470 = vrot.lane.b32.xlu0 %v468, 64
  %v471 = vpop.permute.xlu0 %470
  %s473 = scalar_lea.vmem [#allocation3], 48
  %474 = vst.msk [vmem:[%s473] sm:$0xff] %vm124, %v471
  %s475 = scalar_lea.vmem [#allocation2], 56
  %v476 = vld [vmem:[%s475] sm:$0xff]
  %v477 = vpack.c.bf16 %v468, %v468
  %479 = vrot.lane.b32.xlu0 %v477, 64
  %v480 = vpop.permute.xlu0 %479
  %v482 = vsel %vm124, %v480, 0
  %484 = vmatpush.bf16.msra.mxu0 0
  %485 = vmatpush.bf16.msra.mxu0 0
  %486 = vmatpush.bf16.msra.mxu0 0
  %487 = vmatpush.bf16.msra.mxu0 0
  %488 = vmatpush.bf16.msra.mxu0 0
  %489 = vmatpush.bf16.msra.mxu0 0
  %490 = vmatpush.bf16.msra.mxu0 %v121
  %491 = vmatpush.bf16.msra.mxu0 %v120
  %492 = vmatmul.bf16.gmra.mxu0 %v482
  %v493 = vpop.f32.mrf.mxu0
  %v494 = vadd.f32 0.0, %v493
  %v495 = vpop.f32.mrf.mxu0
  %496 = vdwg.mxu0
  %v497 = vadd.f32 %v476, %v494
  %v498 = vmul.f32 %v497, 0.5
  %v499 = vtanh.pop %v498
  %v500 = vmul.f32 %v499, 0.5
  %v501 = vadd.f32 %v500, 0.5
  %v502 = vtanh.pop %v497
  %v503 = vmul.f32 %v501, %v462
  %505 = vrot.lane.b32.xlu0 %v502, 32
  %v506 = vpop.permute.xlu0 %505
  %v508 = vmul.f32 %v501, %v506
  %510 = vrot.lane.b32.xlu0 %v508, 32
  %v511 = vpop.permute.xlu0 %510
  %v513 = vadd.f32 %v503, %v511
  %v514 = vtanh.pop %v513
  %516 = vrot.lane.b32.xlu0 %v514, 32
  %v517 = vpop.permute.xlu0 %516
  %v519 = vmul.f32 %v501, %v517
  %521 = vrot.lane.b32.xlu0 %v519, 64
  %v522 = vpop.permute.xlu0 %521
  %s524 = scalar_lea.vmem [#allocation3], 56
  %525 = vst.msk [vmem:[%s524] sm:$0xff] %vm124, %v522
  %v526 = vld [vmem:[#allocation3] sm:$0xff]
  %v527 = vld [vmem:[#allocation3 + $0x8] sm:$0xff]
  %v528 = vld [vmem:[#allocation3 + $0x10] sm:$0xff]
  %v529 = vld [vmem:[#allocation3 + $0x18] sm:$0xff]
  %v530 = vld [vmem:[#allocation3 + $0x20] sm:$0xff]
  %v531 = vld [vmem:[#allocation3 + $0x28] sm:$0xff]
  %v532 = vld [vmem:[#allocation3 + $0x30] sm:$0xff]
  %v533 = vld [vmem:[#allocation3 + $0x38] sm:$0xff]
  %v534 = vpack.c.bf16 %v527, %v526
  %v535 = vpack.c.bf16 %v529, %v528
  %v536 = vpack.c.bf16 %v531, %v530
  %v537 = vpack.c.bf16 %v533, %v532
  %v538 = vld [vmem:[%s4] sm:$0xf]
  %v539 = vld [vmem:[%s4 + $0x4] sm:$0xf]
  %v540 = vld [vmem:[%s4 + $0x8] sm:$0xf]
  %v541 = vld [vmem:[%s4 + $0xc] sm:$0xf]
  %v542 = vld [vmem:[%s6] sm:$0x1]
  %v544 = vperm.slane %v542, 0
  %v550 = vunpack.c.l.b16 %v538
  %v551 = vunpack.c.l.b16 %v539
  %v552 = vunpack.c.l.b16 %v540
  %v553 = vunpack.c.l.b16 %v541
  %v554 = vpack.c.b16 %v551, %v550
  %v555 = vpack.c.b16 %v553, %v552
  %v559 = vsel %vm124, %v534, 0
  %v562 = vsel %vm124, %v535, 0
  %v565 = vsel %vm124, %v536, 0
  %v568 = vsel %vm124, %v537, 0
  %570 = vmatpush.bf16.msra.mxu0 0
  %571 = vmatpush.bf16.msra.mxu0 0
  %572 = vmatpush.bf16.msra.mxu0 0
  %573 = vmatpush.bf16.msra.mxu0 0
  %574 = vmatpush.bf16.msra.mxu0 0
  %575 = vmatpush.bf16.msra.mxu0 0
  %576 = vmatpush.bf16.msra.mxu0 %v555
  %577 = vmatpush.bf16.msra.mxu0 %v554
  %578 = vmatmul.bf16.gmra.mxu0 %v559
  %v579 = vpop.f32.mrf.mxu0
  %v580 = vadd.f32 %v544, %v579
  %v581 = vpop.f32.mrf.mxu0
  %v582 = vadd.f32 %v544, %v581
  %583 = vmatmul.bf16.gmra.mxu0 %v562
  %v584 = vpop.f32.mrf.mxu0
  %v585 = vadd.f32 %v544, %v584
  %v586 = vpop.f32.mrf.mxu0
  %v587 = vadd.f32 %v544, %v586
  %588 = vmatmul.bf16.gmra.mxu0 %v565
  %v589 = vpop.f32.mrf.mxu0
  %v590 = vadd.f32 %v544, %v589
  %v591 = vpop.f32.mrf.mxu0
  %v592 = vadd.f32 %v544, %v591
  %593 = vmatmul.bf16.gmra.mxu0 %v568
  %v594 = vpop.f32.mrf.mxu0
  %v595 = vadd.f32 %v544, %v594
  %v596 = vpop.f32.mrf.mxu0
  %v597 = vadd.f32 %v544, %v596
  %598 = vdwg.mxu0
  %599 = vst [vmem:[#allocation2] sm:$0xff] %v580
  %600 = vst [vmem:[#allocation2 + $0x8] sm:$0xff] %v582
  %601 = vst [vmem:[#allocation2 + $0x10] sm:$0xff] %v585
  %602 = vst [vmem:[#allocation2 + $0x18] sm:$0xff] %v587
  %603 = vst [vmem:[#allocation2 + $0x20] sm:$0xff] %v590
  %604 = vst [vmem:[#allocation2 + $0x28] sm:$0xff] %v592
  %605 = vst [vmem:[#allocation2 + $0x30] sm:$0xff] %v595
  %606 = vst [vmem:[#allocation2 + $0x38] sm:$0xff] %v597
  %v607 = vld [vmem:[%s5] sm:$0xf]
  %v608 = vld [vmem:[%s5 + $0x4] sm:$0xf]
  %v609 = vld [vmem:[%s5 + $0x8] sm:$0xf]
  %v610 = vld [vmem:[%s5 + $0xc] sm:$0xf]
  %v611 = vld [vmem:[#allocation2] sm:$0xff]
  %v616 = vunpack.c.l.b16 %v607
  %v617 = vunpack.c.l.b16 %v608
  %v618 = vunpack.c.l.b16 %v609
  %v619 = vunpack.c.l.b16 %v610
  %v620 = vpack.c.b16 %v617, %v616
  %v621 = vpack.c.b16 %v619, %v618
  %624 = vmatpush.bf16.msra.mxu0 0
  %625 = vmatpush.bf16.msra.mxu0 0
  %626 = vmatpush.bf16.msra.mxu0 0
  %627 = vmatpush.bf16.msra.mxu0 0
  %628 = vmatpush.bf16.msra.mxu0 0
  %629 = vmatpush.bf16.msra.mxu0 0
  %630 = vmatpush.bf16.msra.mxu0 %v621
  %631 = vmatpush.bf16.msra.mxu0 %v620
  %632 = vmatmul.bf16.gmra.mxu0 %v126
  %v633 = vpop.f32.mrf.mxu0
  %v634 = vadd.f32 0.0, %v633
  %v635 = vpop.f32.mrf.mxu0
  %636 = vdwg.mxu0
  %v637 = vadd.f32 %v611, %v634
  %v638 = vmul.f32 %v637, 0.5
  %v639 = vtanh.pop %v638
  %v640 = vmul.f32 %v639, 0.5
  %v641 = vadd.f32 %v640, 0.5
  %v642 = vtanh.pop %v637
  %v643 = vmul.f32 %v641, 0.0
  %645 = vrot.lane.b32.xlu0 %v642, 32
  %v646 = vpop.permute.xlu0 %645
  %v648 = vmul.f32 %v641, %v646
  %650 = vrot.lane.b32.xlu0 %v648, 32
  %v651 = vpop.permute.xlu0 %650
  %v653 = vadd.f32 %v643, %v651
  %v654 = vtanh.pop %v653
  %656 = vrot.lane.b32.xlu0 %v654, 32
  %v657 = vpop.permute.xlu0 %656
  %v659 = vmul.f32 %v641, %v657
  %v660 = vld [vmem:[%s169] sm:$0xff]
  %v661 = vpack.c.bf16 %v659, %v659
  %663 = vrot.lane.b32.xlu0 %v661, 64
  %v664 = vpop.permute.xlu0 %663
  %v666 = vsel %vm124, %v664, 0
  %668 = vmatpush.bf16.msra.mxu0 0
  %669 = vmatpush.bf16.msra.mxu0 0
  %670 = vmatpush.bf16.msra.mxu0 0
  %671 = vmatpush.bf16.msra.mxu0 0
  %672 = vmatpush.bf16.msra.mxu0 0
  %673 = vmatpush.bf16.msra.mxu0 0
  %674 = vmatpush.bf16.msra.mxu0 %v621
  %675 = vmatpush.bf16.msra.mxu0 %v620
  %676 = vmatmul.bf16.gmra.mxu0 %v666
  %v677 = vpop.f32.mrf.mxu0
  %v678 = vadd.f32 0.0, %v677
  %v679 = vpop.f32.mrf.mxu0
  %680 = vdwg.mxu0
  %v681 = vadd.f32 %v660, %v678
  %v682 = vmul.f32 %v681, 0.5
  %v683 = vtanh.pop %v682
  %v684 = vmul.f32 %v683, 0.5
  %v685 = vadd.f32 %v684, 0.5
  %v686 = vtanh.pop %v681
  %v687 = vmul.f32 %v685, %v653
  %689 = vrot.lane.b32.xlu0 %v686, 32
  %v690 = vpop.permute.xlu0 %689
  %v692 = vmul.f32 %v685, %v690
  %694 = vrot.lane.b32.xlu0 %v692, 32
  %v695 = vpop.permute.xlu0 %694
  %v697 = vadd.f32 %v687, %v695
  %v698 = vtanh.pop %v697
  %700 = vrot.lane.b32.xlu0 %v698, 32
  %v701 = vpop.permute.xlu0 %700
  %v703 = vmul.f32 %v685, %v701
  %v704 = vld [vmem:[%s220] sm:$0xff]
  %v705 = vpack.c.bf16 %v703, %v703
  %707 = vrot.lane.b32.xlu0 %v705, 64
  %v708 = vpop.permute.xlu0 %707
  %v710 = vsel %vm124, %v708, 0
  %712 = vmatpush.bf16.msra.mxu0 0
  %713 = vmatpush.bf16.msra.mxu0 0
  %714 = vmatpush.bf16.msra.mxu0 0
  %715 = vmatpush.bf16.msra.mxu0 0
  %716 = vmatpush.bf16.msra.mxu0 0
  %717 = vmatpush.bf16.msra.mxu0 0
  %718 = vmatpush.bf16.msra.mxu0 %v621
  %719 = vmatpush.bf16.msra.mxu0 %v620
  %720 = vmatmul.bf16.gmra.mxu0 %v710
  %v721 = vpop.f32.mrf.mxu0
  %v722 = vadd.f32 0.0, %v721
  %v723 = vpop.f32.mrf.mxu0
  %724 = vdwg.mxu0
  %v725 = vadd.f32 %v704, %v722
  %v726 = vmul.f32 %v725, 0.5
  %v727 = vtanh.pop %v726
  %v728 = vmul.f32 %v727, 0.5
  %v729 = vadd.f32 %v728, 0.5
  %v730 = vtanh.pop %v725
  %v731 = vmul.f32 %v729, %v697
  %733 = vrot.lane.b32.xlu0 %v730, 32
  %v734 = vpop.permute.xlu0 %733
  %v736 = vmul.f32 %v729, %v734
  %738 = vrot.lane.b32.xlu0 %v736, 32
  %v739 = vpop.permute.xlu0 %738
  %v741 = vadd.f32 %v731, %v739
  %v742 = vtanh.pop %v741
  %744 = vrot.lane.b32.xlu0 %v742, 32
  %v745 = vpop.permute.xlu0 %744
  %v747 = vmul.f32 %v729, %v745
  %v748 = vld [vmem:[%s271] sm:$0xff]
  %v749 = vpack.c.bf16 %v747, %v747
  %751 = vrot.lane.b32.xlu0 %v749, 64
  %v752 = vpop.permute.xlu0 %751
  %v754 = vsel %vm124, %v752, 0
  %756 = vmatpush.bf16.msra.mxu0 0
  %757 = vmatpush.bf16.msra.mxu0 0
  %758 = vmatpush.bf16.msra.mxu0 0
  %759 = vmatpush.bf16.msra.mxu0 0
  %760 = vmatpush.bf16.msra.mxu0 0
  %761 = vmatpush.bf16.msra.mxu0 0
  %762 = vmatpush.bf16.msra.mxu0 %v621
  %763 = vmatpush.bf16.msra.mxu0 %v620
  %764 = vmatmul.bf16.gmra.mxu0 %v754
  %v765 = vpop.f32.mrf.mxu0
  %v766 = vadd.f32 0.0, %v765
  %v767 = vpop.f32.mrf.mxu0
  %768 = vdwg.mxu0
  %v769 = vadd.f32 %v748, %v766
  %v770 = vmul.f32 %v769, 0.5
  %v771 = vtanh.pop %v770
  %v772 = vmul.f32 %v771, 0.5
  %v773 = vadd.f32 %v772, 0.5
  %v774 = vtanh.pop %v769
  %v775 = vmul.f32 %v773, %v741
  %777 = vrot.lane.b32.xlu0 %v774, 32
  %v778 = vpop.permute.xlu0 %777
  %v780 = vmul.f32 %v773, %v778
  %782 = vrot.lane.b32.xlu0 %v780, 32
  %v783 = vpop.permute.xlu0 %782
  %v785 = vadd.f32 %v775, %v783
  %v786 = vtanh.pop %v785
  %788 = vrot.lane.b32.xlu0 %v786, 32
  %v789 = vpop.permute.xlu0 %788
  %v791 = vmul.f32 %v773, %v789
  %v792 = vld [vmem:[%s322] sm:$0xff]
  %v793 = vpack.c.bf16 %v791, %v791
  %795 = vrot.lane.b32.xlu0 %v793, 64
  %v796 = vpop.permute.xlu0 %795
  %v798 = vsel %vm124, %v796, 0
  %800 = vmatpush.bf16.msra.mxu0 0
  %801 = vmatpush.bf16.msra.mxu0 0
  %802 = vmatpush.bf16.msra.mxu0 0
  %803 = vmatpush.bf16.msra.mxu0 0
  %804 = vmatpush.bf16.msra.mxu0 0
  %805 = vmatpush.bf16.msra.mxu0 0
  %806 = vmatpush.bf16.msra.mxu0 %v621
  %807 = vmatpush.bf16.msra.mxu0 %v620
  %808 = vmatmul.bf16.gmra.mxu0 %v798
  %v809 = vpop.f32.mrf.mxu0
  %v810 = vadd.f32 0.0, %v809
  %v811 = vpop.f32.mrf.mxu0
  %812 = vdwg.mxu0
  %v813 = vadd.f32 %v792, %v810
  %v814 = vmul.f32 %v813, 0.5
  %v815 = vtanh.pop %v814
  %v816 = vmul.f32 %v815, 0.5
  %v817 = vadd.f32 %v816, 0.5
  %v818 = vtanh.pop %v813
  %v819 = vmul.f32 %v817, %v785
  %821 = vrot.lane.b32.xlu0 %v818, 32
  %v822 = vpop.permute.xlu0 %821
  %v824 = vmul.f32 %v817, %v822
  %826 = vrot.lane.b32.xlu0 %v824, 32
  %v827 = vpop.permute.xlu0 %826
  %v829 = vadd.f32 %v819, %v827
  %v830 = vtanh.pop %v829
  %832 = vrot.lane.b32.xlu0 %v830, 32
  %v833 = vpop.permute.xlu0 %832
  %v835 = vmul.f32 %v817, %v833
  %v836 = vld [vmem:[%s373] sm:$0xff]
  %v837 = vpack.c.bf16 %v835, %v835
  %839 = vrot.lane.b32.xlu0 %v837, 64
  %v840 = vpop.permute.xlu0 %839
  %v842 = vsel %vm124, %v840, 0
  %844 = vmatpush.bf16.msra.mxu0 0
  %845 = vmatpush.bf16.msra.mxu0 0
  %846 = vmatpush.bf16.msra.mxu0 0
  %847 = vmatpush.bf16.msra.mxu0 0
  %848 = vmatpush.bf16.msra.mxu0 0
  %849 = vmatpush.bf16.msra.mxu0 0
  %850 = vmatpush.bf16.msra.mxu0 %v621
  %851 = vmatpush.bf16.msra.mxu0 %v620
  %852 = vmatmul.bf16.gmra.mxu0 %v842
  %v853 = vpop.f32.mrf.mxu0
  %v854 = vadd.f32 0.0, %v853
  %v855 = vpop.f32.mrf.mxu0
  %856 = vdwg.mxu0
  %v857 = vadd.f32 %v836, %v854
  %v858 = vmul.f32 %v857, 0.5
  %v859 = vtanh.pop %v858
  %v860 = vmul.f32 %v859, 0.5
  %v861 = vadd.f32 %v860, 0.5
  %v862 = vtanh.pop %v857
  %v863 = vmul.f32 %v861, %v829
  %865 = vrot.lane.b32.xlu0 %v862, 32
  %v866 = vpop.permute.xlu0 %865
  %v868 = vmul.f32 %v861, %v866
  %870 = vrot.lane.b32.xlu0 %v868, 32
  %v871 = vpop.permute.xlu0 %870
  %v873 = vadd.f32 %v863, %v871
  %v874 = vtanh.pop %v873
  %876 = vrot.lane.b32.xlu0 %v874, 32
  %v877 = vpop.permute.xlu0 %876
  %v879 = vmul.f32 %v861, %v877
  %v880 = vld [vmem:[%s424] sm:$0xff]
  %v881 = vpack.c.bf16 %v879, %v879
  %883 = vrot.lane.b32.xlu0 %v881, 64
  %v884 = vpop.permute.xlu0 %883
  %v886 = vsel %vm124, %v884, 0
  %888 = vmatpush.bf16.msra.mxu0 0
  %889 = vmatpush.bf16.msra.mxu0 0
  %890 = vmatpush.bf16.msra.mxu0 0
  %891 = vmatpush.bf16.msra.mxu0 0
  %892 = vmatpush.bf16.msra.mxu0 0
  %893 = vmatpush.bf16.msra.mxu0 0
  %894 = vmatpush.bf16.msra.mxu0 %v621
  %895 = vmatpush.bf16.msra.mxu0 %v620
  %896 = vmatmul.bf16.gmra.mxu0 %v886
  %v897 = vpop.f32.mrf.mxu0
  %v898 = vadd.f32 0.0, %v897
  %v899 = vpop.f32.mrf.mxu0
  %900 = vdwg.mxu0
  %v901 = vadd.f32 %v880, %v898
  %v902 = vmul.f32 %v901, 0.5
  %v903 = vtanh.pop %v902
  %v904 = vmul.f32 %v903, 0.5
  %v905 = vadd.f32 %v904, 0.5
  %v906 = vtanh.pop %v901
  %v907 = vmul.f32 %v905, %v873
  %909 = vrot.lane.b32.xlu0 %v906, 32
  %v910 = vpop.permute.xlu0 %909
  %v912 = vmul.f32 %v905, %v910
  %914 = vrot.lane.b32.xlu0 %v912, 32
  %v915 = vpop.permute.xlu0 %914
  %v917 = vadd.f32 %v907, %v915
  %v918 = vtanh.pop %v917
  %920 = vrot.lane.b32.xlu0 %v918, 32
  %v921 = vpop.permute.xlu0 %920
  %v923 = vmul.f32 %v905, %v921
  %v924 = vld [vmem:[%s475] sm:$0xff]
  %v925 = vpack.c.bf16 %v923, %v923
  %927 = vrot.lane.b32.xlu0 %v925, 64
  %v928 = vpop.permute.xlu0 %927
  %v930 = vsel %vm124, %v928, 0
  %932 = vmatpush.bf16.msra.mxu0 0
  %933 = vmatpush.bf16.msra.mxu0 0
  %934 = vmatpush.bf16.msra.mxu0 0
  %935 = vmatpush.bf16.msra.mxu0 0
  %936 = vmatpush.bf16.msra.mxu0 0
  %937 = vmatpush.bf16.msra.mxu0 0
  %938 = vmatpush.bf16.msra.mxu0 %v621
  %939 = vmatpush.bf16.msra.mxu0 %v620
  %940 = vmatmul.bf16.gmra.mxu0 %v930
  %v941 = vpop.f32.mrf.mxu0
  %v942 = vadd.f32 0.0, %v941
  %v943 = vpop.f32.mrf.mxu0
  %944 = vdwg.mxu0
  %v945 = vadd.f32 %v924, %v942
  %v946 = vmul.f32 %v945, 0.5
  %v947 = vtanh.pop %v946
  %v948 = vmul.f32 %v947, 0.5
  %v949 = vadd.f32 %v948, 0.5
  %v950 = vtanh.pop %v945
  %v951 = vmul.f32 %v949, %v917
  %953 = vrot.lane.b32.xlu0 %v950, 32
  %v954 = vpop.permute.xlu0 %953
  %v956 = vmul.f32 %v949, %v954
  %958 = vrot.lane.b32.xlu0 %v956, 32
  %v959 = vpop.permute.xlu0 %958
  %v961 = vadd.f32 %v951, %v959
  %v962 = vtanh.pop %v961
  %964 = vrot.lane.b32.xlu0 %v962, 32
  %v965 = vpop.permute.xlu0 %964
  %v967 = vmul.f32 %v949, %v965
  %v968 = vld [vmem:[%s7] sm:$0xff]
  %v969 = vld [vmem:[%s7 + $0x8] sm:$0xff]
  %v970 = vld [vmem:[%s7 + $0x10] sm:$0xff]
  %v971 = vld [vmem:[%s7 + $0x18] sm:$0xff]
  %v972 = vld [vmem:[%s8] sm:$0x1]
  %v974 = vperm.slane %v972, 0
  %977 = vrot.lane.b32.xlu0 %v967, 64
  %v978 = vpop.permute.xlu0 %977
  %v979 = vsel %vm124, %v978, 0
  %981 = vmatpush.msra.mxu0 0.0
  %982 = vmatpush.msra.mxu0 0.0
  %983 = vmatpush.msra.mxu0 0.0
  %984 = vmatpush.msra.mxu0 0.0
  %985 = vmatpush.msra.mxu0 0.0
  %986 = vmatpush.msra.mxu0 0.0
  %987 = vmatpush.msra.mxu0 0.0
  %988 = vmatpush.msra.mxu0 0.0
  %989 = vmatpush.msra.mxu0 0.0
  %990 = vmatpush.msra.mxu0 0.0
  %991 = vmatpush.msra.mxu0 0.0
  %992 = vmatpush.msra.mxu0 0.0
  %993 = vmatpush.msra.mxu0 %v971
  %994 = vmatpush.msra.mxu0 %v970
  %995 = vmatpush.msra.mxu0 %v969
  %996 = vmatpush.msra.mxu0 %v968
  %997 = vmatmul.f32.gmra.mxu0 %v979
  %v998 = vpop.f32.mrf.mxu0
  %v999 = vadd.f32 %v974, %v998
  %1000 = vdwg.mxu0
  %vm1001 = vcmask 31744
  %1002 = vst.msk [vmem:[%s9] sm:$0xff] %vm1001, %v999
  // Predicated region
  $region38: #{sequential_lstm_forward.1} parent=0 // pred_check
    _
  $region39: #{sequential_lstm_forward.1} parent=0 // pred_check_branch
    %1004 = sbr.rel (0) target = $region41
  $region40: #{sequential_lstm_forward.1} parent=0 // pred_region
    _
  $region41: #{sequential_lstm_forward.1} parent=0 // pred_fallthru
    _
  // Predicated region
  $region42: #{sequential_lstm_forward.1} parent=0 // pred_check
    _
  $region43: #{sequential_lstm_forward.1} parent=0 // pred_check_branch
    %1006 = sbr.rel (0) target = $region45
  $region44: #{sequential_lstm_forward.1} parent=0 // pred_region
    _
  $region45: #{sequential_lstm_forward.1} parent=0 // pred_fallthru
    _

</llo_original>
